<compile_context>
chip_gen: v7x
topology: tpu7x:2x2x1
jax: 0.10.0
libtpu: 0.0.40
codegen_flags: <defaults>
</compile_context>

<pallas_src>
import math
from functools import partial

import jax
import jax.numpy as jnp
from jax.experimental import pallas as pl
from jax.experimental.pallas import tpu as pltpu


# ----------------------------- Pallas kernel --------------------------------
def rtfm_kernel(q_ref, k_ref, v_ref,
                wq_ref, bq_ref, wk_ref, bk_ref, wv_ref, bv_ref,
                wo_ref, bo_ref, wln_ref, bln_ref, w12_ref, b12_ref,
                out_ref,
                *, b_s, nq, nk, h, d_k, d_v):
    f32 = jnp.float32
    bf16 = jnp.bfloat16

    q = q_ref[...]                       # (b_s*nq, d_model) f32
    k = k_ref[...]                       # (b_s*nk, d_model) f32
    v = v_ref[...]                       # (b_s*nk, d_model) f32

    # ---- QKV projections on the full flattened slab (bf16 in, f32 acc).
    #      1/sqrt(d_k) is already folded into wq/bq (param prep).
    Q = jnp.dot(q.astype(bf16), wq_ref[...], preferred_element_type=f32) + bq_ref[...]
    K = jnp.dot(k.astype(bf16), wk_ref[...], preferred_element_type=f32) + bk_ref[...]
    V = jnp.dot(v.astype(bf16), wv_ref[...], preferred_element_type=f32) + bv_ref[...]

    # ---- relayout whole slab to (h*b_s, n, d); batch ordering is (head, batch)
    def to_heads(x, n, d):
        xh = pltpu.einshape("mhd->hmd", x.reshape(b_s * n, h, d))   # (h, b_s*n, d)
        return xh.reshape(h * b_s, n, d)

    Qh = to_heads(Q, nq, d_k).astype(bf16)   # (h*b_s, nq, d_k)
    Kh = to_heads(K, nk, d_k).astype(bf16)   # (h*b_s, nk, d_k)
    Vh = to_heads(V, nk, d_v).astype(bf16)   # (h*b_s, nk, d_v)

    # ---- attention over all (head, batch) pairs in one batched einsum pair
    att = jnp.einsum("bqd,bkd->bqk", Qh, Kh,
                     preferred_element_type=f32)                    # (h*b_s, nq, nk)
    att = att - jnp.max(att, axis=-1, keepdims=True)                # stable softmax (f32)
    att = jnp.exp(att)
    att = att * pl.reciprocal(jnp.sum(att, axis=-1, keepdims=True), approx=True)
    # dropout omitted (eval mode / deterministic)

    ob = jnp.einsum("bqk,bkd->bqd", att.astype(bf16), Vh,
                    preferred_element_type=f32)                     # (h*b_s, nq, d_v)

    # back to (b_s*nq, h*d_v)  ==  torch permute(0,2,1,3).contiguous().view(...)
    concat = pltpu.einshape("hmd->mhd", ob.reshape(h, b_s * nq, d_v)) \
                  .reshape(b_s * nq, h * d_v)

    # ---- output projection + residual ----
    sa = jnp.dot(concat.astype(bf16), wo_ref[...], preferred_element_type=f32) + bo_ref[...]
    r1 = q + sa                                                     # (b_s*nq, d_model) f32

    # ---- "LN" (a Linear layer in the reference module) ----
    r1o = jnp.dot(r1.astype(bf16), wln_ref[...], preferred_element_type=f32) + bln_ref[...]

    # ---- folded MLP: Linear(d_model->3072) o Linear(3072->d_model) == one
    #      (d_model x d_model) Linear, since ReLU comes only after both layers.
    mlp = jnp.dot(r1o.astype(bf16), w12_ref[...], preferred_element_type=f32) + b12_ref[...]
    mlp = jnp.maximum(mlp, 0.0)

    out_ref[...] = (mlp + r1).astype(out_ref.dtype)


# ----------------------------- param preparation ------------------------------
def prepare_params(params, *, d_k):
    """Fold MLP (w1@w2, b1@w2+b2), fold 1/sqrt(d_k) into wq/bq, cast weights to bf16."""
    f32 = jnp.float32
    bf16 = jnp.bfloat16
    scale = 1.0 / math.sqrt(d_k)
    w12 = jnp.dot(params["w1"].astype(f32), params["w2"].astype(f32))          # (d_model, d_model)
    b12 = jnp.dot(params["b1"].astype(f32), params["w2"].astype(f32)) + params["b2"].astype(f32)
    return dict(
        wq=(params["wq"] * scale).astype(bf16), bq=(params["bq"] * scale).astype(f32),
        wk=params["wk"].astype(bf16),           bk=params["bk"].astype(f32),
        wv=params["wv"].astype(bf16),           bv=params["bv"].astype(f32),
        wo=params["wo"].astype(bf16),           bo=params["bo"].astype(f32),
        wln=params["wln"].astype(bf16),         bln=params["bln"].astype(f32),
        w12=w12.astype(bf16),                   b12=b12,
    )


# ------------------------------- wrapper -------------------------------------
def rtfm_forward(queries, keys, values, prep, *, h, d_k, d_v):
    b_s, nq, d_model = queries.shape
    nk = keys.shape[1]

    # flatten rows once in the wrapper
    q2d = queries.reshape(b_s * nq, d_model)
    k2d = keys.reshape(b_s * nk, d_model)
    v2d = values.reshape(b_s * nk, d_model)

    # single invocation, everything whole-array resident in VMEM (no grid, no
    # double-buffering of the now-tiny weight set)
    vmem = pl.BlockSpec(memory_space=pltpu.MemorySpace.VMEM)
    kernel = partial(rtfm_kernel, b_s=b_s, nq=nq, nk=nk, h=h, d_k=d_k, d_v=d_v)

    out2d = pl.pallas_call(
        kernel,
        out_shape=jax.ShapeDtypeStruct((b_s * nq, d_model), queries.dtype),
        in_specs=[vmem] * 15,
        out_specs=vmem,
    )(
        q2d, k2d, v2d,
        prep["wq"], prep["bq"], prep["wk"], prep["bk"], prep["wv"], prep["bv"],
        prep["wo"], prep["bo"], prep["wln"], prep["bln"], prep["w12"], prep["b12"],
    )
    return out2d.reshape(b_s, nq, d_model)


# ------------------------- pure-JAX f32 reference (unfolded) ------------------
def rtfm_ref(q, k, v, p, *, h, d_k, d_v):
    b_s, nq, d_model = q.shape
    nk = k.shape[1]
    lin = lambda x, w, b: x @ w + b
    Q = lin(q, p["wq"], p["bq"]).reshape(b_s, nq, h, d_k).transpose(0, 2, 1, 3)
    K = lin(k, p["wk"], p["bk"]).reshape(b_s, nk, h, d_k).transpose(0, 2, 3, 1)
    V = lin(v, p["wv"], p["bv"]).reshape(b_s, nk, h, d_v).transpose(0, 2, 1, 3)
    att = jnp.matmul(Q, K) / math.sqrt(d_k)
    att = jax.nn.softmax(att, axis=-1)
    out = jnp.matmul(att, V).transpose(0, 2, 1, 3).reshape(b_s, nq, h * d_v)
    sa = lin(out, p["wo"], p["bo"])
    r1 = q + sa
    r1o = lin(r1, p["wln"], p["bln"])
    mlp = jax.nn.relu(lin(lin(r1o, p["w1"], p["b1"]), p["w2"], p["b2"]))
    return mlp + r1


# --------------------------------- main ---------------------------------------
if __name__ == "__main__":
    b_s, nq, nk = 2, 8, 8
    d_model, d_k, d_v, h = 32, 8, 8, 4
    d_ff = 3072  # hardcoded in RTFM's mlp

    key = jax.random.PRNGKey(0)
    ks = jax.random.split(key, 12)

    params = {
        "wq": 0.001 * jax.random.normal(ks[0], (d_model, h * d_k), jnp.float32),
        "bq": jnp.zeros((1, h * d_k), jnp.float32),
        "wk": 0.001 * jax.random.normal(ks[1], (d_model, h * d_k), jnp.float32),
        "bk": jnp.zeros((1, h * d_k), jnp.float32),
        "wv": 0.001 * jax.random.normal(ks[2], (d_model, h * d_v), jnp.float32),
        "bv": jnp.zeros((1, h * d_v), jnp.float32),
        "wo": 0.001 * jax.random.normal(ks[3], (h * d_v, d_model), jnp.float32),
        "bo": jnp.zeros((1, d_model), jnp.float32),
        "wln": 0.02 * jax.random.normal(ks[4], (d_model, d_model), jnp.float32),
        "bln": 0.02 * jax.random.normal(ks[5], (1, d_model), jnp.float32),
        "w1": 0.02 * jax.random.normal(ks[6], (d_model, d_ff), jnp.float32),
        "b1": 0.02 * jax.random.normal(ks[7], (1, d_ff), jnp.float32),
        "w2": 0.02 * jax.random.normal(ks[8], (d_ff, d_model), jnp.float32),
        "b2": 0.02 * jax.random.normal(ks[9], (1, d_model), jnp.float32),
    }

    queries = jax.random.normal(ks[10], (b_s, nq, d_model), jnp.float32)
    keys_in = jax.random.normal(ks[11], (b_s, nk, d_model), jnp.float32)
    values = jax.random.normal(jax.random.fold_in(key, 99), (b_s, nk, d_model), jnp.float32)

    prep = prepare_params(params, d_k=d_k)
    out = rtfm_forward(queries, keys_in, values, prep, h=h, d_k=d_k, d_v=d_v)
    out = jax.block_until_ready(out)

    ref = rtfm_ref(queries, keys_in, values, params, h=h, d_k=d_k, d_v=d_v)
    assert out.shape == (b_s, nq, d_model)
    # bf16 MXU operands with f32 accumulation (+ approx reciprocal) vs f32 ref
    assert jnp.allclose(out, ref, atol=2e-2, rtol=2e-2), (
        f"max abs err {jnp.max(jnp.abs(out - ref))}")

    print("KERNEL_OK")
</pallas_src>

<mosaic_0001>
module attributes {stable_mosaic.version = 11 : i64} {
  func.func @rtfm_kernel(%arg0: memref<16x32xf32, #tpu.memory_space<vmem>>, %arg1: memref<16x32xf32, #tpu.memory_space<vmem>>, %arg2: memref<16x32xf32, #tpu.memory_space<vmem>>, %arg3: memref<32x32xbf16, #tpu.memory_space<vmem>>, %arg4: memref<1x32xf32, #tpu.memory_space<vmem>>, %arg5: memref<32x32xbf16, #tpu.memory_space<vmem>>, %arg6: memref<1x32xf32, #tpu.memory_space<vmem>>, %arg7: memref<32x32xbf16, #tpu.memory_space<vmem>>, %arg8: memref<1x32xf32, #tpu.memory_space<vmem>>, %arg9: memref<32x32xbf16, #tpu.memory_space<vmem>>, %arg10: memref<1x32xf32, #tpu.memory_space<vmem>>, %arg11: memref<32x32xbf16, #tpu.memory_space<vmem>>, %arg12: memref<1x32xf32, #tpu.memory_space<vmem>>, %arg13: memref<32x32xbf16, #tpu.memory_space<vmem>>, %arg14: memref<1x32xf32, #tpu.memory_space<vmem>>, %arg15: memref<16x32xf32, #tpu.memory_space<vmem>>) attributes {dimension_semantics = [], scalar_prefetch = 0 : i64, scratch_operands = 0 : i64, tpu.core_type = #tpu.core_type<tc>} {
    %c0 = arith.constant 0 : index
    %c0_0 = arith.constant 0 : index
    %0 = vector.load %arg0[%c0, %c0_0] : memref<16x32xf32, #tpu.memory_space<vmem>>, vector<16x32xf32>
    %c0_1 = arith.constant 0 : index
    %c0_2 = arith.constant 0 : index
    %1 = vector.load %arg1[%c0_1, %c0_2] : memref<16x32xf32, #tpu.memory_space<vmem>>, vector<16x32xf32>
    %c0_3 = arith.constant 0 : index
    %c0_4 = arith.constant 0 : index
    %2 = vector.load %arg2[%c0_3, %c0_4] : memref<16x32xf32, #tpu.memory_space<vmem>>, vector<16x32xf32>
    %3 = arith.truncf %0 : vector<16x32xf32> to vector<16x32xbf16>
    %c0_5 = arith.constant 0 : index
    %c0_6 = arith.constant 0 : index
    %4 = vector.load %arg3[%c0_5, %c0_6] : memref<32x32xbf16, #tpu.memory_space<vmem>>, vector<32x32xbf16>
    %cst = arith.constant dense<0.000000e+00> : vector<16x32xf32>
    %5 = tpu.matmul %3, %4, %cst {dimension_numbers = #tpu.dot_dimension_numbers<[1], [0], [0], [1], [0, 0, 1, 1], [], []>} : vector<16x32xbf16>, vector<32x32xbf16>, vector<16x32xf32> -> vector<16x32xf32>
    %c0_7 = arith.constant 0 : index
    %c0_8 = arith.constant 0 : index
    %6 = vector.load %arg4[%c0_7, %c0_8] : memref<1x32xf32, #tpu.memory_space<vmem>>, vector<1x32xf32>
    %7 = vector.broadcast %6 : vector<1x32xf32> to vector<16x32xf32>
    %8 = arith.addf %5, %7 : vector<16x32xf32>
    %9 = arith.truncf %1 : vector<16x32xf32> to vector<16x32xbf16>
    %c0_9 = arith.constant 0 : index
    %c0_10 = arith.constant 0 : index
    %10 = vector.load %arg5[%c0_9, %c0_10] : memref<32x32xbf16, #tpu.memory_space<vmem>>, vector<32x32xbf16>
    %cst_11 = arith.constant dense<0.000000e+00> : vector<16x32xf32>
    %11 = tpu.matmul %9, %10, %cst_11 {dimension_numbers = #tpu.dot_dimension_numbers<[1], [0], [0], [1], [0, 0, 1, 1], [], []>} : vector<16x32xbf16>, vector<32x32xbf16>, vector<16x32xf32> -> vector<16x32xf32>
    %c0_12 = arith.constant 0 : index
    %c0_13 = arith.constant 0 : index
    %12 = vector.load %arg6[%c0_12, %c0_13] : memref<1x32xf32, #tpu.memory_space<vmem>>, vector<1x32xf32>
    %13 = vector.broadcast %12 : vector<1x32xf32> to vector<16x32xf32>
    %14 = arith.addf %11, %13 : vector<16x32xf32>
    %15 = arith.truncf %2 : vector<16x32xf32> to vector<16x32xbf16>
    %c0_14 = arith.constant 0 : index
    %c0_15 = arith.constant 0 : index
    %16 = vector.load %arg7[%c0_14, %c0_15] : memref<32x32xbf16, #tpu.memory_space<vmem>>, vector<32x32xbf16>
    %cst_16 = arith.constant dense<0.000000e+00> : vector<16x32xf32>
    %17 = tpu.matmul %15, %16, %cst_16 {dimension_numbers = #tpu.dot_dimension_numbers<[1], [0], [0], [1], [0, 0, 1, 1], [], []>} : vector<16x32xbf16>, vector<32x32xbf16>, vector<16x32xf32> -> vector<16x32xf32>
    %c0_17 = arith.constant 0 : index
    %c0_18 = arith.constant 0 : index
    %18 = vector.load %arg8[%c0_17, %c0_18] : memref<1x32xf32, #tpu.memory_space<vmem>>, vector<1x32xf32>
    %19 = vector.broadcast %18 : vector<1x32xf32> to vector<16x32xf32>
    %20 = arith.addf %17, %19 : vector<16x32xf32>
    %21 = vector.shape_cast %8 : vector<16x32xf32> to vector<16x4x8xf32>
    %22 = tpu.transpose %21, [1, 0, 2] : vector<16x4x8xf32> -> vector<4x16x8xf32>
    %23 = vector.shape_cast %22 : vector<4x16x8xf32> to vector<8x8x8xf32>
    %24 = arith.truncf %23 : vector<8x8x8xf32> to vector<8x8x8xbf16>
    %25 = vector.shape_cast %14 : vector<16x32xf32> to vector<16x4x8xf32>
    %26 = tpu.transpose %25, [1, 0, 2] : vector<16x4x8xf32> -> vector<4x16x8xf32>
    %27 = vector.shape_cast %26 : vector<4x16x8xf32> to vector<8x8x8xf32>
    %28 = arith.truncf %27 : vector<8x8x8xf32> to vector<8x8x8xbf16>
    %29 = vector.shape_cast %20 : vector<16x32xf32> to vector<16x4x8xf32>
    %30 = tpu.transpose %29, [1, 0, 2] : vector<16x4x8xf32> -> vector<4x16x8xf32>
    %31 = vector.shape_cast %30 : vector<4x16x8xf32> to vector<8x8x8xf32>
    %32 = arith.truncf %31 : vector<8x8x8xf32> to vector<8x8x8xbf16>
    "tpu.trace_start"() <{level = 10 : i32, message = "bqd,bkd->bqk"}> : () -> ()
    %cst_19 = arith.constant dense<0.000000e+00> : vector<8x8x8xf32>
    %33 = tpu.matmul %24, %28, %cst_19 {dimension_numbers = #tpu.dot_dimension_numbers<[2], [2], [1], [1], [0, 0, 0, 1, 1, 1], [0], [0]>} : vector<8x8x8xbf16>, vector<8x8x8xbf16>, vector<8x8x8xf32> -> vector<8x8x8xf32>
    "tpu.trace_stop"() : () -> ()
    %cst_20 = arith.constant dense<0xFF800000> : vector<8x8xf32>
    %34 = vector.multi_reduction <maximumf>, %33, %cst_20 [2] : vector<8x8x8xf32> to vector<8x8xf32>
    %35 = vector.shape_cast %34 : vector<8x8xf32> to vector<8x8x1xf32>
    %36 = vector.broadcast %35 : vector<8x8x1xf32> to vector<8x8x8xf32>
    %37 = arith.subf %33, %36 : vector<8x8x8xf32>
    %38 = math.exp %37 : vector<8x8x8xf32>
    %cst_21 = arith.constant dense<0.000000e+00> : vector<8x8xf32>
    %39 = vector.multi_reduction <add>, %38, %cst_21 [2] : vector<8x8x8xf32> to vector<8x8xf32>
    %40 = vector.shape_cast %39 : vector<8x8xf32> to vector<8x8x1xf32>
    %41 = tpu.reciprocal %40 {approx = true} : vector<8x8x1xf32> -> vector<8x8x1xf32>
    %42 = vector.broadcast %41 : vector<8x8x1xf32> to vector<8x8x8xf32>
    %43 = arith.mulf %38, %42 : vector<8x8x8xf32>
    %44 = arith.truncf %43 : vector<8x8x8xf32> to vector<8x8x8xbf16>
    "tpu.trace_start"() <{level = 10 : i32, message = "bqk,bkd->bqd"}> : () -> ()
    %cst_22 = arith.constant dense<0.000000e+00> : vector<8x8x8xf32>
    %45 = tpu.matmul %44, %32, %cst_22 {dimension_numbers = #tpu.dot_dimension_numbers<[2], [1], [1], [2], [0, 0, 0, 1, 1, 2], [0], [0]>} : vector<8x8x8xbf16>, vector<8x8x8xbf16>, vector<8x8x8xf32> -> vector<8x8x8xf32>
    "tpu.trace_stop"() : () -> ()
    %46 = vector.shape_cast %45 : vector<8x8x8xf32> to vector<4x16x8xf32>
    %47 = tpu.transpose %46, [1, 0, 2] : vector<4x16x8xf32> -> vector<16x4x8xf32>
    %48 = vector.shape_cast %47 : vector<16x4x8xf32> to vector<16x32xf32>
    %49 = arith.truncf %48 : vector<16x32xf32> to vector<16x32xbf16>
    %c0_23 = arith.constant 0 : index
    %c0_24 = arith.constant 0 : index
    %50 = vector.load %arg9[%c0_23, %c0_24] : memref<32x32xbf16, #tpu.memory_space<vmem>>, vector<32x32xbf16>
    %cst_25 = arith.constant dense<0.000000e+00> : vector<16x32xf32>
    %51 = tpu.matmul %49, %50, %cst_25 {dimension_numbers = #tpu.dot_dimension_numbers<[1], [0], [0], [1], [0, 0, 1, 1], [], []>} : vector<16x32xbf16>, vector<32x32xbf16>, vector<16x32xf32> -> vector<16x32xf32>
    %c0_26 = arith.constant 0 : index
    %c0_27 = arith.constant 0 : index
    %52 = vector.load %arg10[%c0_26, %c0_27] : memref<1x32xf32, #tpu.memory_space<vmem>>, vector<1x32xf32>
    %53 = vector.broadcast %52 : vector<1x32xf32> to vector<16x32xf32>
    %54 = arith.addf %51, %53 : vector<16x32xf32>
    %55 = arith.addf %0, %54 : vector<16x32xf32>
    %56 = arith.truncf %55 : vector<16x32xf32> to vector<16x32xbf16>
    %c0_28 = arith.constant 0 : index
    %c0_29 = arith.constant 0 : index
    %57 = vector.load %arg11[%c0_28, %c0_29] : memref<32x32xbf16, #tpu.memory_space<vmem>>, vector<32x32xbf16>
    %cst_30 = arith.constant dense<0.000000e+00> : vector<16x32xf32>
    %58 = tpu.matmul %56, %57, %cst_30 {dimension_numbers = #tpu.dot_dimension_numbers<[1], [0], [0], [1], [0, 0, 1, 1], [], []>} : vector<16x32xbf16>, vector<32x32xbf16>, vector<16x32xf32> -> vector<16x32xf32>
    %c0_31 = arith.constant 0 : index
    %c0_32 = arith.constant 0 : index
    %59 = vector.load %arg12[%c0_31, %c0_32] : memref<1x32xf32, #tpu.memory_space<vmem>>, vector<1x32xf32>
    %60 = vector.broadcast %59 : vector<1x32xf32> to vector<16x32xf32>
    %61 = arith.addf %58, %60 : vector<16x32xf32>
    %62 = arith.truncf %61 : vector<16x32xf32> to vector<16x32xbf16>
    %c0_33 = arith.constant 0 : index
    %c0_34 = arith.constant 0 : index
    %63 = vector.load %arg13[%c0_33, %c0_34] : memref<32x32xbf16, #tpu.memory_space<vmem>>, vector<32x32xbf16>
    %cst_35 = arith.constant dense<0.000000e+00> : vector<16x32xf32>
    %64 = tpu.matmul %62, %63, %cst_35 {dimension_numbers = #tpu.dot_dimension_numbers<[1], [0], [0], [1], [0, 0, 1, 1], [], []>} : vector<16x32xbf16>, vector<32x32xbf16>, vector<16x32xf32> -> vector<16x32xf32>
    %c0_36 = arith.constant 0 : index
    %c0_37 = arith.constant 0 : index
    %65 = vector.load %arg14[%c0_36, %c0_37] : memref<1x32xf32, #tpu.memory_space<vmem>>, vector<1x32xf32>
    %66 = vector.broadcast %65 : vector<1x32xf32> to vector<16x32xf32>
    %67 = arith.addf %64, %66 : vector<16x32xf32>
    %cst_38 = arith.constant 0.000000e+00 : f32
    %68 = vector.broadcast %cst_38 : f32 to vector<16x32xf32>
    %69 = arith.maximumf %67, %68 : vector<16x32xf32>
    %70 = arith.addf %69, %55 : vector<16x32xf32>
    %c0_39 = arith.constant 0 : index
    %c0_40 = arith.constant 0 : index
    %71 = vector.load %arg15[%c0_39, %c0_40] : memref<16x32xf32, #tpu.memory_space<vmem>>, vector<16x32xf32>
    tpu.vector_store %arg15[%c0_39, %c0_40], %70 {strides = array<i32>} : memref<16x32xf32, #tpu.memory_space<vmem>>, vector<16x32xf32>,
    return
  }
}

</mosaic_0001>

<llo_original>
// kernel: tpu_custom_call.1
$region0: #{tpu_custom_call.1}
  #allocation0 [shape = 'u32[]', space=smem, size = 0x4, offset = 0x4, fixed_abs, tag = 'smem constant byte address 0x4 - core index']
  #allocation1 [shape = 'u32[144,128]{1,0:T(1,128)}', space=vmem, size = 0x12000, scoped, tag = 'internal scratch']
  %s0 = inlined_call_operand.hbm [shape: f32[16,32], index: 0, kind: input, shape index: {}]
  %s1 = inlined_call_operand.hbm [shape: f32[16,32], index: 1, kind: input, shape index: {}]
  %s2 = inlined_call_operand.hbm [shape: f32[16,32], index: 2, kind: input, shape index: {}]
  %s3 = inlined_call_operand.hbm [shape: bf16[32,32], index: 3, kind: input, shape index: {}]
  %s4 = inlined_call_operand.vmem [shape: f32[1,32], index: 4, kind: input, shape index: {}]
  %s5 = inlined_call_operand.vmem [shape: bf16[32,32], index: 5, kind: input, shape index: {}]
  %s6 = inlined_call_operand.hbm [shape: f32[1,32], index: 6, kind: input, shape index: {}]
  %s7 = inlined_call_operand.hbm [shape: bf16[32,32], index: 7, kind: input, shape index: {}]
  %s8 = inlined_call_operand.hbm [shape: f32[1,32], index: 8, kind: input, shape index: {}]
  %s9 = inlined_call_operand.vmem [shape: bf16[32,32], index: 9, kind: input, shape index: {}]
  %s10 = inlined_call_operand.hbm [shape: f32[1,32], index: 10, kind: input, shape index: {}]
  %s11 = inlined_call_operand.hbm [shape: bf16[32,32], index: 11, kind: input, shape index: {}]
  %s12 = inlined_call_operand.hbm [shape: f32[1,32], index: 12, kind: input, shape index: {}]
  %s13 = inlined_call_operand.vmem [shape: bf16[32,32], index: 13, kind: input, shape index: {}]
  %s14 = inlined_call_operand.vmem [shape: f32[1,32], index: 14, kind: input, shape index: {}]
  %s15 = inlined_call_operand.hbm [shape: f32[16,32], index: 15, kind: output, shape index: {}]
  %s16 = sld [smem:[#allocation0]]
  $region110: #{tpu_custom_call.1} parent=0
    _
  %s18 = ssub.s32 1, %s16
  %s19 = scalar_select 0, %s18, %s16
  $region1: #{tpu_custom_call.1} parent=0
    #allocation2 [shape = 'u8[8192]{0}', space=vmem, size = 0x2000, scoped, tag = 'input window, operand 0, single buffered']
    #allocation3 [shape = 's32[1]{0}', space=sflag, size = 0x4, scoped, tag = 'scoped memory for tpu_custom_call.1']
    #allocation4 [shape = 's32[1]{0}', space=sflag, size = 0x4, scoped, tag = 'scoped memory for tpu_custom_call.1']
    #allocation5 [shape = 'u8[8192]{0}', space=vmem, size = 0x2000, scoped, tag = 'input window, operand 1, single buffered']
    #allocation6 [shape = 's32[1]{0}', space=sflag, size = 0x4, scoped, tag = 'scoped memory for tpu_custom_call.1']
    #allocation7 [shape = 'u8[8192]{0}', space=vmem, size = 0x2000, scoped, tag = 'input window, operand 2, single buffered']
    #allocation8 [shape = 'u8[8192]{0}', space=vmem, size = 0x2000, scoped, tag = 'input window, operand 3, single buffered']
    #allocation9 [shape = 's32[1]{0}', space=sflag, size = 0x4, scoped, tag = 'scoped memory for tpu_custom_call.1']
    #allocation10 [shape = 'u8[512]{0}', space=vmem, size = 0x400, scoped, tag = 'input window, operand 6, single buffered']
    #allocation11 [shape = 'u8[8192]{0}', space=vmem, size = 0x2000, scoped, tag = 'input window, operand 7, single buffered']
    #allocation12 [shape = 's32[1]{0}', space=sflag, size = 0x4, scoped, tag = 'scoped memory for tpu_custom_call.1']
    #allocation13 [shape = 'u8[512]{0}', space=vmem, size = 0x400, scoped, tag = 'input window, operand 8, single buffered']
    #allocation14 [shape = 'u8[512]{0}', space=vmem, size = 0x400, scoped, tag = 'input window, operand 10, single buffered']
    #allocation15 [shape = 's32[1]{0}', space=sflag, size = 0x4, scoped, tag = 'scoped memory for tpu_custom_call.1']
    #allocation16 [shape = 'u8[8192]{0}', space=vmem, size = 0x2000, scoped, tag = 'input window, operand 11, single buffered']
    #allocation17 [shape = 'u8[512]{0}', space=vmem, size = 0x400, scoped, tag = 'input window, operand 12, single buffered']
    #allocation18 [shape = 's32[1]{0}', space=sflag, size = 0x4, scoped, tag = 'scoped memory for tpu_custom_call.1']
    #allocation19 [shape = 'u8[8192]{0}', space=vmem, size = 0x2000, scoped, tag = 'output window, operand 0, single buffered']
    %20 = vsyncpa [#allocation3], 0
    %21 = vsyncpa [#allocation6], 0
    %22 = vsyncpa [#allocation9], 0
    %23 = vsyncpa [#allocation12], 0
    %24 = vsyncpa [#allocation15], 0
    %25 = vsyncpa [#allocation18], 0
    %26 = vsyncpa [#allocation4], 0
    // Predicated region
    $region2: #{tpu_custom_call.1} parent=1 // pred_check
      _
    $region3: #{tpu_custom_call.1} parent=1 // pred_check_branch
      %28 = sbr.rel (0) target = $region5
    $region4: #{tpu_custom_call.1} parent=1 // pred_region
      %s30 = ssub.s32 256, 256
      %31 = vsyncadd [#allocation3], %s30
      %s32 = sshll.u32 [#allocation2], 4
      %s33 = int_to_ptr.vmem [resolvable:$true] %s32
      %38 = dma.hbm_to_vmem [thread:$0]  %s0, 256, %s33, [#allocation3], 128, 128, 8
    $region5: #{tpu_custom_call.1} parent=1 // pred_fallthru
      _
    // Predicated region
    $region6: #{tpu_custom_call.1} parent=1 // pred_check
      _
    $region7: #{tpu_custom_call.1} parent=1 // pred_check_branch
      %40 = sbr.rel (0) target = $region9
    $region8: #{tpu_custom_call.1} parent=1 // pred_region
      %s42 = ssub.s32 256, 256
      %43 = vsyncadd [#allocation6], %s42
      %s44 = sshll.u32 [#allocation5], 4
      %s45 = int_to_ptr.vmem [resolvable:$true] %s44
      %50 = dma.hbm_to_vmem [thread:$0]  %s1, 256, %s45, [#allocation6], 128, 128, 8
    $region9: #{tpu_custom_call.1} parent=1 // pred_fallthru
      _
    // Predicated region
    $region10: #{tpu_custom_call.1} parent=1 // pred_check
      _
    $region11: #{tpu_custom_call.1} parent=1 // pred_check_branch
      %52 = sbr.rel (0) target = $region13
    $region12: #{tpu_custom_call.1} parent=1 // pred_region
      %s54 = ssub.s32 256, 256
      %55 = vsyncadd [#allocation6], %s54
      %s56 = sshll.u32 [#allocation7], 4
      %s57 = int_to_ptr.vmem [resolvable:$true] %s56
      %62 = dma.hbm_to_vmem [thread:$0]  %s2, 256, %s57, [#allocation6], 128, 128, 8
    $region13: #{tpu_custom_call.1} parent=1 // pred_fallthru
      _
    // Predicated region
    $region14: #{tpu_custom_call.1} parent=1 // pred_check
      _
    $region15: #{tpu_custom_call.1} parent=1 // pred_check_branch
      %64 = sbr.rel (0) target = $region17
    $region16: #{tpu_custom_call.1} parent=1 // pred_region
      %s66 = ssub.s32 256, 256
      %67 = vsyncadd [#allocation9], %s66
      %s68 = sshll.u32 [#allocation8], 4
      %s69 = int_to_ptr.vmem [resolvable:$true] %s68
      %74 = dma.hbm_to_vmem [thread:$0]  %s3, 256, %s69, [#allocation9], 64, 64, 4
    $region17: #{tpu_custom_call.1} parent=1 // pred_fallthru
      _
    // Predicated region
    $region18: #{tpu_custom_call.1} parent=1 // pred_check
      _
    $region19: #{tpu_custom_call.1} parent=1 // pred_check_branch
      %76 = sbr.rel (0) target = $region21
    $region20: #{tpu_custom_call.1} parent=1 // pred_region
      _
    $region21: #{tpu_custom_call.1} parent=1 // pred_fallthru
      _
    // Predicated region
    $region22: #{tpu_custom_call.1} parent=1 // pred_check
      _
    $region23: #{tpu_custom_call.1} parent=1 // pred_check_branch
      %78 = sbr.rel (0) target = $region25
    $region24: #{tpu_custom_call.1} parent=1 // pred_region
      _
    $region25: #{tpu_custom_call.1} parent=1 // pred_fallthru
      _
    // Predicated region
    $region26: #{tpu_custom_call.1} parent=1 // pred_check
      _
    $region27: #{tpu_custom_call.1} parent=1 // pred_check_branch
      %80 = sbr.rel (0) target = $region29
    $region28: #{tpu_custom_call.1} parent=1 // pred_region
      %s82 = ssub.s32 16, 16
      %83 = vsyncadd [#allocation9], %s82
      %s85 = sshll.u32 [#allocation10], 4
      %s86 = int_to_ptr.vmem [resolvable:$true] %s85
      %88 = dma.hbm_to_vmem [thread:$0]  %s6, 16, %s86, [#allocation9]
    $region29: #{tpu_custom_call.1} parent=1 // pred_fallthru
      _
    // Predicated region
    $region30: #{tpu_custom_call.1} parent=1 // pred_check
      _
    $region31: #{tpu_custom_call.1} parent=1 // pred_check_branch
      %90 = sbr.rel (0) target = $region33
    $region32: #{tpu_custom_call.1} parent=1 // pred_region
      %s92 = ssub.s32 256, 256
      %93 = vsyncadd [#allocation12], %s92
      %s94 = sshll.u32 [#allocation11], 4
      %s95 = int_to_ptr.vmem [resolvable:$true] %s94
      %100 = dma.hbm_to_vmem [thread:$0]  %s7, 256, %s95, [#allocation12], 64, 64, 4
    $region33: #{tpu_custom_call.1} parent=1 // pred_fallthru
      _
    // Predicated region
    $region34: #{tpu_custom_call.1} parent=1 // pred_check
      _
    $region35: #{tpu_custom_call.1} parent=1 // pred_check_branch
      %102 = sbr.rel (0) target = $region37
    $region36: #{tpu_custom_call.1} parent=1 // pred_region
      %s104 = ssub.s32 16, 16
      %105 = vsyncadd [#allocation12], %s104
      %s107 = sshll.u32 [#allocation13], 4
      %s108 = int_to_ptr.vmem [resolvable:$true] %s107
      %110 = dma.hbm_to_vmem [thread:$0]  %s8, 16, %s108, [#allocation12]
    $region37: #{tpu_custom_call.1} parent=1 // pred_fallthru
      _
    // Predicated region
    $region38: #{tpu_custom_call.1} parent=1 // pred_check
      _
    $region39: #{tpu_custom_call.1} parent=1 // pred_check_branch
      %112 = sbr.rel (0) target = $region41
    $region40: #{tpu_custom_call.1} parent=1 // pred_region
      _
    $region41: #{tpu_custom_call.1} parent=1 // pred_fallthru
      _
    // Predicated region
    $region42: #{tpu_custom_call.1} parent=1 // pred_check
      _
    $region43: #{tpu_custom_call.1} parent=1 // pred_check_branch
      %114 = sbr.rel (0) target = $region45
    $region44: #{tpu_custom_call.1} parent=1 // pred_region
      %s116 = ssub.s32 16, 16
      %117 = vsyncadd [#allocation15], %s116
      %s119 = sshll.u32 [#allocation14], 4
      %s120 = int_to_ptr.vmem [resolvable:$true] %s119
      %122 = dma.hbm_to_vmem [thread:$0]  %s10, 16, %s120, [#allocation15]
    $region45: #{tpu_custom_call.1} parent=1 // pred_fallthru
      _
    // Predicated region
    $region46: #{tpu_custom_call.1} parent=1 // pred_check
      _
    $region47: #{tpu_custom_call.1} parent=1 // pred_check_branch
      %124 = sbr.rel (0) target = $region49
    $region48: #{tpu_custom_call.1} parent=1 // pred_region
      %s126 = ssub.s32 256, 256
      %127 = vsyncadd [#allocation15], %s126
      %s128 = sshll.u32 [#allocation16], 4
      %s129 = int_to_ptr.vmem [resolvable:$true] %s128
      %134 = dma.hbm_to_vmem [thread:$0]  %s11, 256, %s129, [#allocation15], 64, 64, 4
    $region49: #{tpu_custom_call.1} parent=1 // pred_fallthru
      _
    // Predicated region
    $region50: #{tpu_custom_call.1} parent=1 // pred_check
      _
    $region51: #{tpu_custom_call.1} parent=1 // pred_check_branch
      %136 = sbr.rel (0) target = $region53
    $region52: #{tpu_custom_call.1} parent=1 // pred_region
      %s138 = ssub.s32 16, 16
      %139 = vsyncadd [#allocation18], %s138
      %s141 = sshll.u32 [#allocation17], 4
      %s142 = int_to_ptr.vmem [resolvable:$true] %s141
      %144 = dma.hbm_to_vmem [thread:$0]  %s12, 16, %s142, [#allocation18]
    $region53: #{tpu_custom_call.1} parent=1 // pred_fallthru
      _
    // Predicated region
    $region54: #{tpu_custom_call.1} parent=1 // pred_check
      _
    $region55: #{tpu_custom_call.1} parent=1 // pred_check_branch
      %146 = sbr.rel (0) target = $region57
    $region56: #{tpu_custom_call.1} parent=1 // pred_region
      _
    $region57: #{tpu_custom_call.1} parent=1 // pred_fallthru
      _
    // Predicated region
    $region58: #{tpu_custom_call.1} parent=1 // pred_check
      _
    $region59: #{tpu_custom_call.1} parent=1 // pred_check_branch
      %148 = sbr.rel (0) target = $region61
    $region60: #{tpu_custom_call.1} parent=1 // pred_region
      _
    $region61: #{tpu_custom_call.1} parent=1 // pred_fallthru
      _
    // Predicated region
    $region62: #{tpu_custom_call.1} parent=1 // pred_check
      _
    $region63: #{tpu_custom_call.1} parent=1 // pred_check_branch
      %150 = sbr.rel (0) target = $region65
    $region64: #{tpu_custom_call.1} parent=1 // pred_region
      %151 = dma.done [#allocation3], 256
    $region65: #{tpu_custom_call.1} parent=1 // pred_fallthru
      _
    // Predicated region
    $region66: #{tpu_custom_call.1} parent=1 // pred_check
      _
    $region67: #{tpu_custom_call.1} parent=1 // pred_check_branch
      %153 = sbr.rel (0) target = $region69
    $region68: #{tpu_custom_call.1} parent=1 // pred_region
      %154 = dma.done [#allocation6], 256
    $region69: #{tpu_custom_call.1} parent=1 // pred_fallthru
      _
    // Predicated region
    $region70: #{tpu_custom_call.1} parent=1 // pred_check
      _
    $region71: #{tpu_custom_call.1} parent=1 // pred_check_branch
      %156 = sbr.rel (0) target = $region73
    $region72: #{tpu_custom_call.1} parent=1 // pred_region
      %157 = dma.done [#allocation6], 256
    $region73: #{tpu_custom_call.1} parent=1 // pred_fallthru
      _
    // Predicated region
    $region74: #{tpu_custom_call.1} parent=1 // pred_check
      _
    $region75: #{tpu_custom_call.1} parent=1 // pred_check_branch
      %159 = sbr.rel (0) target = $region77
    $region76: #{tpu_custom_call.1} parent=1 // pred_region
      %160 = dma.done [#allocation9], 256
    $region77: #{tpu_custom_call.1} parent=1 // pred_fallthru
      _
    // Predicated region
    $region78: #{tpu_custom_call.1} parent=1 // pred_check
      _
    $region79: #{tpu_custom_call.1} parent=1 // pred_check_branch
      %162 = sbr.rel (0) target = $region81
    $region80: #{tpu_custom_call.1} parent=1 // pred_region
      %163 = dma.done [#allocation9], 16
    $region81: #{tpu_custom_call.1} parent=1 // pred_fallthru
      _
    // Predicated region
    $region82: #{tpu_custom_call.1} parent=1 // pred_check
      _
    $region83: #{tpu_custom_call.1} parent=1 // pred_check_branch
      %165 = sbr.rel (0) target = $region85
    $region84: #{tpu_custom_call.1} parent=1 // pred_region
      %166 = dma.done [#allocation12], 256
    $region85: #{tpu_custom_call.1} parent=1 // pred_fallthru
      _
    // Predicated region
    $region86: #{tpu_custom_call.1} parent=1 // pred_check
      _
    $region87: #{tpu_custom_call.1} parent=1 // pred_check_branch
      %168 = sbr.rel (0) target = $region89
    $region88: #{tpu_custom_call.1} parent=1 // pred_region
      %169 = dma.done [#allocation12], 16
    $region89: #{tpu_custom_call.1} parent=1 // pred_fallthru
      _
    // Predicated region
    $region90: #{tpu_custom_call.1} parent=1 // pred_check
      _
    $region91: #{tpu_custom_call.1} parent=1 // pred_check_branch
      %171 = sbr.rel (0) target = $region93
    $region92: #{tpu_custom_call.1} parent=1 // pred_region
      %172 = dma.done [#allocation15], 16
    $region93: #{tpu_custom_call.1} parent=1 // pred_fallthru
      _
    // Predicated region
    $region94: #{tpu_custom_call.1} parent=1 // pred_check
      _
    $region95: #{tpu_custom_call.1} parent=1 // pred_check_branch
      %174 = sbr.rel (0) target = $region97
    $region96: #{tpu_custom_call.1} parent=1 // pred_region
      %175 = dma.done [#allocation15], 256
    $region97: #{tpu_custom_call.1} parent=1 // pred_fallthru
      _
    // Predicated region
    $region98: #{tpu_custom_call.1} parent=1 // pred_check
      _
    $region99: #{tpu_custom_call.1} parent=1 // pred_check_branch
      %177 = sbr.rel (0) target = $region101
    $region100: #{tpu_custom_call.1} parent=1 // pred_region
      %178 = dma.done [#allocation18], 16
    $region101: #{tpu_custom_call.1} parent=1 // pred_fallthru
      _
    %v180 = vld [vmem:[#allocation2] sm:$0xff]
    %v181 = vld [vmem:[#allocation2 + $0x8] sm:$0xff]
    %v182 = vld [vmem:[#allocation5] sm:$0xff]
    %v183 = vld [vmem:[#allocation5 + $0x8] sm:$0xff]
    %v184 = vld [vmem:[#allocation7] sm:$0xff]
    %v185 = vld [vmem:[#allocation7 + $0x8] sm:$0xff]
    %v186 = vpack.c.bf16 %v181, %v180
    %v187 = vld [vmem:[#allocation8] sm:$0xf]
    %v188 = vld [vmem:[#allocation8 + $0x4] sm:$0xf]
    %v189 = vld [vmem:[#allocation8 + $0x8] sm:$0xf]
    %v190 = vld [vmem:[#allocation8 + $0xc] sm:$0xf]
    %v191 = vld [vmem:[%s4] sm:$0x1]
    %v193 = vlaneseq
    %v194 = vshrl.u32 %v193, 7
    %v195 = vsub.s32 0, %v194
    %v196 = vrot.slane %v191, %v195
    %v202 = vunpack.c.l.b16 %v187
    %v203 = vunpack.c.l.b16 %v188
    %v204 = vunpack.c.l.b16 %v189
    %v205 = vunpack.c.l.b16 %v190
    %v206 = vpack.c.b16 %v203, %v202
    %v207 = vpack.c.b16 %v205, %v204
    %vm210 = vcmask 261120
    %v212 = vsel %vm210, %v186, 0
    %214 = vmatprep.subr.bf16.mxu0 0
    %215 = vmatpush1.bf16.msra.mxu0 %v206
    %216 = vmatprep.subr.bf16.mxu0 0
    %217 = vmatpush1.bf16.msra.mxu0 %v207
    %218 = vmatprep.subr.bf16.mxu0 0
    %219 = vmatpush1.bf16.msra.mxu0 0
    %220 = vmatprep.subr.bf16.mxu0 0
    %221 = vmatpush1.bf16.msra.mxu0 0
    %222 = vmatprep.subr.bf16.mxu0 0
    %223 = vmatpush1.bf16.msra.mxu0 0
    %224 = vmatprep.subr.bf16.mxu0 0
    %225 = vmatpush1.bf16.msra.mxu0 0
    %226 = vmatprep.subr.bf16.mxu0 0
    %227 = vmatpush1.bf16.msra.mxu0 0
    %228 = vmatprep.subr.bf16.mxu0 0
    %229 = vmatpush1.bf16.msra.mxu0 0
    %230 = vmatprep.subr.bf16.mxu0 0
    %231 = vmatpush1.bf16.msra.mxu0 0
    %232 = vmatprep.subr.bf16.mxu0 0
    %233 = vmatpush1.bf16.msra.mxu0 0
    %234 = vmatprep.subr.bf16.mxu0 0
    %235 = vmatpush1.bf16.msra.mxu0 0
    %236 = vmatprep.subr.bf16.mxu0 0
    %237 = vmatpush1.bf16.msra.mxu0 0
    %238 = vmatprep.subr.bf16.mxu0 0
    %239 = vmatpush1.bf16.msra.mxu0 0
    %240 = vmatprep.subr.bf16.mxu0 0
    %241 = vmatpush1.bf16.msra.mxu0 0
    %242 = vmatprep.subr.bf16.mxu0 0
    %243 = vmatpush1.bf16.msra.mxu0 0
    %244 = vmatprep.subr.bf16.mxu0 0
    %245 = vmatpush1.bf16.msra.mxu0 0
    %246 = vmatprep.mubr.bf16.mxu0 0
    %247 = vmatmul.mubr.bf16.gmra.mrb[0].mxu0 %v212
    %v248 = vpop.f32.mrb[0].mxu0
    %v249 = vadd.f32 %v196, %v248
    %v250 = vpop.f32.mrb[0].mxu0
    %v251 = vpop.f32.mrb[0].mxu0
    %v252 = vadd.f32 %v196, %v251
    %v253 = vpop.f32.mrb[0].mxu0
    %254 = vdwg.mxu0
    %v255 = vpack.c.bf16 %v183, %v182
    %v256 = vld [vmem:[%s5] sm:$0xf]
    %v257 = vld [vmem:[%s5 + $0x4] sm:$0xf]
    %v258 = vld [vmem:[%s5 + $0x8] sm:$0xf]
    %v259 = vld [vmem:[%s5 + $0xc] sm:$0xf]
    %v260 = vld [vmem:[#allocation10] sm:$0x1]
    %v262 = vlaneseq
    %v263 = vshrl.u32 %v262, 7
    %v264 = vsub.s32 0, %v263
    %v265 = vrot.slane %v260, %v264
    %v271 = vunpack.c.l.b16 %v256
    %v272 = vunpack.c.l.b16 %v257
    %v273 = vunpack.c.l.b16 %v258
    %v274 = vunpack.c.l.b16 %v259
    %v275 = vpack.c.b16 %v272, %v271
    %v276 = vpack.c.b16 %v274, %v273
    %v280 = vsel %vm210, %v255, 0
    %282 = vmatprep.subr.bf16.mxu0 0
    %283 = vmatpush1.bf16.msra.mxu0 %v275
    %284 = vmatprep.subr.bf16.mxu0 0
    %285 = vmatpush1.bf16.msra.mxu0 %v276
    %286 = vmatprep.subr.bf16.mxu0 0
    %287 = vmatpush1.bf16.msra.mxu0 0
    %288 = vmatprep.subr.bf16.mxu0 0
    %289 = vmatpush1.bf16.msra.mxu0 0
    %290 = vmatprep.subr.bf16.mxu0 0
    %291 = vmatpush1.bf16.msra.mxu0 0
    %292 = vmatprep.subr.bf16.mxu0 0
    %293 = vmatpush1.bf16.msra.mxu0 0
    %294 = vmatprep.subr.bf16.mxu0 0
    %295 = vmatpush1.bf16.msra.mxu0 0
    %296 = vmatprep.subr.bf16.mxu0 0
    %297 = vmatpush1.bf16.msra.mxu0 0
    %298 = vmatprep.subr.bf16.mxu0 0
    %299 = vmatpush1.bf16.msra.mxu0 0
    %300 = vmatprep.subr.bf16.mxu0 0
    %301 = vmatpush1.bf16.msra.mxu0 0
    %302 = vmatprep.subr.bf16.mxu0 0
    %303 = vmatpush1.bf16.msra.mxu0 0
    %304 = vmatprep.subr.bf16.mxu0 0
    %305 = vmatpush1.bf16.msra.mxu0 0
    %306 = vmatprep.subr.bf16.mxu0 0
    %307 = vmatpush1.bf16.msra.mxu0 0
    %308 = vmatprep.subr.bf16.mxu0 0
    %309 = vmatpush1.bf16.msra.mxu0 0
    %310 = vmatprep.subr.bf16.mxu0 0
    %311 = vmatpush1.bf16.msra.mxu0 0
    %312 = vmatprep.subr.bf16.mxu0 0
    %313 = vmatpush1.bf16.msra.mxu0 0
    %314 = vmatprep.mubr.bf16.mxu0 0
    %315 = vmatmul.mubr.bf16.gmra.mrb[0].mxu0 %v280
    %v316 = vpop.f32.mrb[0].mxu0
    %v317 = vadd.f32 %v265, %v316
    %v318 = vpop.f32.mrb[0].mxu0
    %v319 = vpop.f32.mrb[0].mxu0
    %v320 = vadd.f32 %v265, %v319
    %v321 = vpop.f32.mrb[0].mxu0
    %322 = vdwg.mxu0
    %v323 = vpack.c.bf16 %v185, %v184
    %v324 = vld [vmem:[#allocation11] sm:$0xf]
    %v325 = vld [vmem:[#allocation11 + $0x4] sm:$0xf]
    %v326 = vld [vmem:[#allocation11 + $0x8] sm:$0xf]
    %v327 = vld [vmem:[#allocation11 + $0xc] sm:$0xf]
    %v328 = vld [vmem:[#allocation13] sm:$0x1]
    %v330 = vlaneseq
    %v331 = vshrl.u32 %v330, 7
    %v332 = vsub.s32 0, %v331
    %v333 = vrot.slane %v328, %v332
    %v339 = vunpack.c.l.b16 %v324
    %v340 = vunpack.c.l.b16 %v325
    %v341 = vunpack.c.l.b16 %v326
    %v342 = vunpack.c.l.b16 %v327
    %v343 = vpack.c.b16 %v340, %v339
    %v344 = vpack.c.b16 %v342, %v341
    %v348 = vsel %vm210, %v323, 0
    %350 = vmatprep.subr.bf16.mxu0 0
    %351 = vmatpush1.bf16.msra.mxu0 %v343
    %352 = vmatprep.subr.bf16.mxu0 0
    %353 = vmatpush1.bf16.msra.mxu0 %v344
    %354 = vmatprep.subr.bf16.mxu0 0
    %355 = vmatpush1.bf16.msra.mxu0 0
    %356 = vmatprep.subr.bf16.mxu0 0
    %357 = vmatpush1.bf16.msra.mxu0 0
    %358 = vmatprep.subr.bf16.mxu0 0
    %359 = vmatpush1.bf16.msra.mxu0 0
    %360 = vmatprep.subr.bf16.mxu0 0
    %361 = vmatpush1.bf16.msra.mxu0 0
    %362 = vmatprep.subr.bf16.mxu0 0
    %363 = vmatpush1.bf16.msra.mxu0 0
    %364 = vmatprep.subr.bf16.mxu0 0
    %365 = vmatpush1.bf16.msra.mxu0 0
    %366 = vmatprep.subr.bf16.mxu0 0
    %367 = vmatpush1.bf16.msra.mxu0 0
    %368 = vmatprep.subr.bf16.mxu0 0
    %369 = vmatpush1.bf16.msra.mxu0 0
    %370 = vmatprep.subr.bf16.mxu0 0
    %371 = vmatpush1.bf16.msra.mxu0 0
    %372 = vmatprep.subr.bf16.mxu0 0
    %373 = vmatpush1.bf16.msra.mxu0 0
    %374 = vmatprep.subr.bf16.mxu0 0
    %375 = vmatpush1.bf16.msra.mxu0 0
    %376 = vmatprep.subr.bf16.mxu0 0
    %377 = vmatpush1.bf16.msra.mxu0 0
    %378 = vmatprep.subr.bf16.mxu0 0
    %379 = vmatpush1.bf16.msra.mxu0 0
    %380 = vmatprep.subr.bf16.mxu0 0
    %381 = vmatpush1.bf16.msra.mxu0 0
    %382 = vmatprep.mubr.bf16.mxu0 0
    %383 = vmatmul.mubr.bf16.gmra.mrb[0].mxu0 %v348
    %v384 = vpop.f32.mrb[0].mxu0
    %v385 = vadd.f32 %v333, %v384
    %v386 = vpop.f32.mrb[0].mxu0
    %v387 = vpop.f32.mrb[0].mxu0
    %v388 = vadd.f32 %v333, %v387
    %v389 = vpop.f32.mrb[0].mxu0
    %390 = vdwg.mxu0
    %393 = vrot.lane.b32.xlu0 %v249, 120
    %v394 = vpop.permute.xlu0 %393
    %395 = vrot.lane.b32.xlu0 %v252, 120
    %v396 = vpop.permute.xlu0 %395
    %399 = vrot.lane.b32.xlu0 %v249, 112
    %v400 = vpop.permute.xlu0 %399
    %401 = vrot.lane.b32.xlu0 %v252, 112
    %v402 = vpop.permute.xlu0 %401
    %405 = vrot.lane.b32.xlu0 %v249, 104
    %v406 = vpop.permute.xlu0 %405
    %407 = vrot.lane.b32.xlu0 %v252, 104
    %v408 = vpop.permute.xlu0 %407
    %v411 = vcombine.low %v249, %v400
    %v412 = vcombine.high %v249, %v400
    %v414 = vunpack.c.l.s4 1983009808
    %v415 = vunpack.c.0.s8 %v414
    %v416 = vlaneseq
    %v417 = vshrl.u32 %v416, 7
    %v418 = vsub.s32 %v415, %v417
    %v419 = vrot.slane %v411, %v418
    %v421 = vunpack.c.l.s4 1983009808
    %v422 = vunpack.c.0.s8 %v421
    %v423 = vlaneseq
    %v424 = vshrl.u32 %v423, 7
    %v425 = vsub.s32 %v422, %v424
    %v426 = vrot.slane %v412, %v425
    %v427 = vcombine.low %v394, %v406
    %v428 = vcombine.high %v394, %v406
    %v430 = vunpack.c.l.s4 1983009808
    %v431 = vunpack.c.0.s8 %v430
    %v432 = vlaneseq
    %v433 = vshrl.u32 %v432, 7
    %v434 = vsub.s32 %v431, %v433
    %v435 = vrot.slane %v427, %v434
    %v437 = vunpack.c.l.s4 1983009808
    %v438 = vunpack.c.0.s8 %v437
    %v439 = vlaneseq
    %v440 = vshrl.u32 %v439, 7
    %v441 = vsub.s32 %v438, %v440
    %v442 = vrot.slane %v428, %v441
    %v443 = vcombine.low %v419, %v435
    %v444 = vcombine.high %v419, %v435
    %v446 = vunpack.c.l.s4 1934713408
    %v447 = vunpack.c.0.s8 %v446
    %v448 = vlaneseq
    %v449 = vshrl.u32 %v448, 7
    %v450 = vsub.s32 %v447, %v449
    %v451 = vrot.slane %v443, %v450
    %v453 = vunpack.c.l.s4 1934713408
    %v454 = vunpack.c.0.s8 %v453
    %v455 = vlaneseq
    %v456 = vshrl.u32 %v455, 7
    %v457 = vsub.s32 %v454, %v456
    %v458 = vrot.slane %v444, %v457
    %v459 = vcombine.low %v426, %v442
    %v460 = vcombine.high %v426, %v442
    %v462 = vunpack.c.l.s4 1934713408
    %v463 = vunpack.c.0.s8 %v462
    %v464 = vlaneseq
    %v465 = vshrl.u32 %v464, 7
    %v466 = vsub.s32 %v463, %v465
    %v467 = vrot.slane %v459, %v466
    %v469 = vunpack.c.l.s4 1934713408
    %v470 = vunpack.c.0.s8 %v469
    %v471 = vlaneseq
    %v472 = vshrl.u32 %v471, 7
    %v473 = vsub.s32 %v470, %v472
    %v474 = vrot.slane %v460, %v473
    %v475 = vcombine.high %v451, 0.0
    %v476 = vcombine.high %v458, 0.0
    %v477 = vcombine.high %v467, 0.0
    %v478 = vcombine.high %v474, 0.0
    %v479 = vcombine.low %v252, %v402
    %v480 = vcombine.high %v252, %v402
    %v482 = vunpack.c.l.s4 1983009808
    %v483 = vunpack.c.0.s8 %v482
    %v484 = vlaneseq
    %v485 = vshrl.u32 %v484, 7
    %v486 = vsub.s32 %v483, %v485
    %v487 = vrot.slane %v479, %v486
    %v489 = vunpack.c.l.s4 1983009808
    %v490 = vunpack.c.0.s8 %v489
    %v491 = vlaneseq
    %v492 = vshrl.u32 %v491, 7
    %v493 = vsub.s32 %v490, %v492
    %v494 = vrot.slane %v480, %v493
    %v495 = vcombine.low %v396, %v408
    %v496 = vcombine.high %v396, %v408
    %v498 = vunpack.c.l.s4 1983009808
    %v499 = vunpack.c.0.s8 %v498
    %v500 = vlaneseq
    %v501 = vshrl.u32 %v500, 7
    %v502 = vsub.s32 %v499, %v501
    %v503 = vrot.slane %v495, %v502
    %v505 = vunpack.c.l.s4 1983009808
    %v506 = vunpack.c.0.s8 %v505
    %v507 = vlaneseq
    %v508 = vshrl.u32 %v507, 7
    %v509 = vsub.s32 %v506, %v508
    %v510 = vrot.slane %v496, %v509
    %v511 = vcombine.low %v487, %v503
    %v512 = vcombine.high %v487, %v503
    %v514 = vunpack.c.l.s4 1934713408
    %v515 = vunpack.c.0.s8 %v514
    %v516 = vlaneseq
    %v517 = vshrl.u32 %v516, 7
    %v518 = vsub.s32 %v515, %v517
    %v519 = vrot.slane %v511, %v518
    %v521 = vunpack.c.l.s4 1934713408
    %v522 = vunpack.c.0.s8 %v521
    %v523 = vlaneseq
    %v524 = vshrl.u32 %v523, 7
    %v525 = vsub.s32 %v522, %v524
    %v526 = vrot.slane %v512, %v525
    %v527 = vcombine.low %v494, %v510
    %v528 = vcombine.high %v494, %v510
    %v530 = vunpack.c.l.s4 1934713408
    %v531 = vunpack.c.0.s8 %v530
    %v532 = vlaneseq
    %v533 = vshrl.u32 %v532, 7
    %v534 = vsub.s32 %v531, %v533
    %v535 = vrot.slane %v527, %v534
    %v537 = vunpack.c.l.s4 1934713408
    %v538 = vunpack.c.0.s8 %v537
    %v539 = vlaneseq
    %v540 = vshrl.u32 %v539, 7
    %v541 = vsub.s32 %v538, %v540
    %v542 = vrot.slane %v528, %v541
    %v543 = vcombine.high %v519, 0.0
    %v544 = vcombine.high %v526, 0.0
    %v545 = vcombine.high %v535, 0.0
    %v546 = vcombine.high %v542, 0.0
    %v547 = vcombine.low %v451, %v458
    %v549 = vunpack.c.l.s4 1983009808
    %v550 = vunpack.c.0.s8 %v549
    %v551 = vlaneseq
    %v552 = vshrl.u32 %v551, 7
    %v553 = vsub.s32 %v550, %v552
    %v554 = vrot.slane %v547, %v553
    %v555 = vcombine.low %v475, %v476
    %v557 = vunpack.c.l.s4 1983009808
    %v558 = vunpack.c.0.s8 %v557
    %v559 = vlaneseq
    %v560 = vshrl.u32 %v559, 7
    %v561 = vsub.s32 %v558, %v560
    %v562 = vrot.slane %v555, %v561
    %v563 = vcombine.low %v467, %v474
    %v565 = vunpack.c.l.s4 1983009808
    %v566 = vunpack.c.0.s8 %v565
    %v567 = vlaneseq
    %v568 = vshrl.u32 %v567, 7
    %v569 = vsub.s32 %v566, %v568
    %v570 = vrot.slane %v563, %v569
    %v571 = vcombine.low %v477, %v478
    %v573 = vunpack.c.l.s4 1983009808
    %v574 = vunpack.c.0.s8 %v573
    %v575 = vlaneseq
    %v576 = vshrl.u32 %v575, 7
    %v577 = vsub.s32 %v574, %v576
    %v578 = vrot.slane %v571, %v577
    %v579 = vcombine.low %v554, %v562
    %v580 = vcombine.high %v554, %v562
    %v582 = vunpack.c.l.s4 1934713408
    %v583 = vunpack.c.0.s8 %v582
    %v584 = vlaneseq
    %v585 = vshrl.u32 %v584, 7
    %v586 = vsub.s32 %v583, %v585
    %v587 = vrot.slane %v579, %v586
    %v589 = vunpack.c.l.s4 1934713408
    %v590 = vunpack.c.0.s8 %v589
    %v591 = vlaneseq
    %v592 = vshrl.u32 %v591, 7
    %v593 = vsub.s32 %v590, %v592
    %v594 = vrot.slane %v580, %v593
    %v595 = vcombine.low %v570, %v578
    %v596 = vcombine.high %v570, %v578
    %v598 = vunpack.c.l.s4 1934713408
    %v599 = vunpack.c.0.s8 %v598
    %v600 = vlaneseq
    %v601 = vshrl.u32 %v600, 7
    %v602 = vsub.s32 %v599, %v601
    %v603 = vrot.slane %v595, %v602
    %v605 = vunpack.c.l.s4 1934713408
    %v606 = vunpack.c.0.s8 %v605
    %v607 = vlaneseq
    %v608 = vshrl.u32 %v607, 7
    %v609 = vsub.s32 %v606, %v608
    %v610 = vrot.slane %v596, %v609
    %v611 = vcombine.low %v587, %v603
    %v612 = vcombine.high %v587, %v603
    %v613 = vcombine.low %v594, %v610
    %v614 = vcombine.high %v594, %v610
    %v615 = vcombine.low %v519, %v526
    %v617 = vunpack.c.l.s4 1983009808
    %v618 = vunpack.c.0.s8 %v617
    %v619 = vlaneseq
    %v620 = vshrl.u32 %v619, 7
    %v621 = vsub.s32 %v618, %v620
    %v622 = vrot.slane %v615, %v621
    %v623 = vcombine.low %v543, %v544
    %v625 = vunpack.c.l.s4 1983009808
    %v626 = vunpack.c.0.s8 %v625
    %v627 = vlaneseq
    %v628 = vshrl.u32 %v627, 7
    %v629 = vsub.s32 %v626, %v628
    %v630 = vrot.slane %v623, %v629
    %v631 = vcombine.low %v535, %v542
    %v633 = vunpack.c.l.s4 1983009808
    %v634 = vunpack.c.0.s8 %v633
    %v635 = vlaneseq
    %v636 = vshrl.u32 %v635, 7
    %v637 = vsub.s32 %v634, %v636
    %v638 = vrot.slane %v631, %v637
    %v639 = vcombine.low %v545, %v546
    %v641 = vunpack.c.l.s4 1983009808
    %v642 = vunpack.c.0.s8 %v641
    %v643 = vlaneseq
    %v644 = vshrl.u32 %v643, 7
    %v645 = vsub.s32 %v642, %v644
    %v646 = vrot.slane %v639, %v645
    %v647 = vcombine.low %v622, %v630
    %v648 = vcombine.high %v622, %v630
    %v650 = vunpack.c.l.s4 1934713408
    %v651 = vunpack.c.0.s8 %v650
    %v652 = vlaneseq
    %v653 = vshrl.u32 %v652, 7
    %v654 = vsub.s32 %v651, %v653
    %v655 = vrot.slane %v647, %v654
    %v657 = vunpack.c.l.s4 1934713408
    %v658 = vunpack.c.0.s8 %v657
    %v659 = vlaneseq
    %v660 = vshrl.u32 %v659, 7
    %v661 = vsub.s32 %v658, %v660
    %v662 = vrot.slane %v648, %v661
    %v663 = vcombine.low %v638, %v646
    %v664 = vcombine.high %v638, %v646
    %v666 = vunpack.c.l.s4 1934713408
    %v667 = vunpack.c.0.s8 %v666
    %v668 = vlaneseq
    %v669 = vshrl.u32 %v668, 7
    %v670 = vsub.s32 %v667, %v669
    %v671 = vrot.slane %v663, %v670
    %v673 = vunpack.c.l.s4 1934713408
    %v674 = vunpack.c.0.s8 %v673
    %v675 = vlaneseq
    %v676 = vshrl.u32 %v675, 7
    %v677 = vsub.s32 %v674, %v676
    %v678 = vrot.slane %v664, %v677
    %v679 = vcombine.low %v655, %v671
    %v680 = vcombine.high %v655, %v671
    %v681 = vcombine.low %v662, %v678
    %v682 = vcombine.high %v662, %v678
    %v683 = vpack.c.bf16 %v611, %v611
    %v684 = vpack.c.bf16 %v679, %v679
    %v685 = vpack.c.bf16 %v612, %v612
    %v686 = vpack.c.bf16 %v680, %v680
    %v687 = vpack.c.bf16 %v613, %v613
    %v688 = vpack.c.bf16 %v681, %v681
    %v689 = vpack.c.bf16 %v614, %v614
    %v690 = vpack.c.bf16 %v682, %v682
    %693 = vrot.lane.b32.xlu0 %v317, 120
    %v694 = vpop.permute.xlu0 %693
    %695 = vrot.lane.b32.xlu0 %v320, 120
    %v696 = vpop.permute.xlu0 %695
    %699 = vrot.lane.b32.xlu0 %v317, 112
    %v700 = vpop.permute.xlu0 %699
    %701 = vrot.lane.b32.xlu0 %v320, 112
    %v702 = vpop.permute.xlu0 %701
    %705 = vrot.lane.b32.xlu0 %v317, 104
    %v706 = vpop.permute.xlu0 %705
    %707 = vrot.lane.b32.xlu0 %v320, 104
    %v708 = vpop.permute.xlu0 %707
    %v711 = vcombine.low %v317, %v700
    %v712 = vcombine.high %v317, %v700
    %v714 = vunpack.c.l.s4 1983009808
    %v715 = vunpack.c.0.s8 %v714
    %v716 = vlaneseq
    %v717 = vshrl.u32 %v716, 7
    %v718 = vsub.s32 %v715, %v717
    %v719 = vrot.slane %v711, %v718
    %v721 = vunpack.c.l.s4 1983009808
    %v722 = vunpack.c.0.s8 %v721
    %v723 = vlaneseq
    %v724 = vshrl.u32 %v723, 7
    %v725 = vsub.s32 %v722, %v724
    %v726 = vrot.slane %v712, %v725
    %v727 = vcombine.low %v694, %v706
    %v728 = vcombine.high %v694, %v706
    %v730 = vunpack.c.l.s4 1983009808
    %v731 = vunpack.c.0.s8 %v730
    %v732 = vlaneseq
    %v733 = vshrl.u32 %v732, 7
    %v734 = vsub.s32 %v731, %v733
    %v735 = vrot.slane %v727, %v734
    %v737 = vunpack.c.l.s4 1983009808
    %v738 = vunpack.c.0.s8 %v737
    %v739 = vlaneseq
    %v740 = vshrl.u32 %v739, 7
    %v741 = vsub.s32 %v738, %v740
    %v742 = vrot.slane %v728, %v741
    %v743 = vcombine.low %v719, %v735
    %v744 = vcombine.high %v719, %v735
    %v746 = vunpack.c.l.s4 1934713408
    %v747 = vunpack.c.0.s8 %v746
    %v748 = vlaneseq
    %v749 = vshrl.u32 %v748, 7
    %v750 = vsub.s32 %v747, %v749
    %v751 = vrot.slane %v743, %v750
    %v753 = vunpack.c.l.s4 1934713408
    %v754 = vunpack.c.0.s8 %v753
    %v755 = vlaneseq
    %v756 = vshrl.u32 %v755, 7
    %v757 = vsub.s32 %v754, %v756
    %v758 = vrot.slane %v744, %v757
    %v759 = vcombine.low %v726, %v742
    %v760 = vcombine.high %v726, %v742
    %v762 = vunpack.c.l.s4 1934713408
    %v763 = vunpack.c.0.s8 %v762
    %v764 = vlaneseq
    %v765 = vshrl.u32 %v764, 7
    %v766 = vsub.s32 %v763, %v765
    %v767 = vrot.slane %v759, %v766
    %v769 = vunpack.c.l.s4 1934713408
    %v770 = vunpack.c.0.s8 %v769
    %v771 = vlaneseq
    %v772 = vshrl.u32 %v771, 7
    %v773 = vsub.s32 %v770, %v772
    %v774 = vrot.slane %v760, %v773
    %v775 = vcombine.high %v751, 0.0
    %v776 = vcombine.high %v758, 0.0
    %v777 = vcombine.high %v767, 0.0
    %v778 = vcombine.high %v774, 0.0
    %v779 = vcombine.low %v320, %v702
    %v780 = vcombine.high %v320, %v702
    %v782 = vunpack.c.l.s4 1983009808
    %v783 = vunpack.c.0.s8 %v782
    %v784 = vlaneseq
    %v785 = vshrl.u32 %v784, 7
    %v786 = vsub.s32 %v783, %v785
    %v787 = vrot.slane %v779, %v786
    %v789 = vunpack.c.l.s4 1983009808
    %v790 = vunpack.c.0.s8 %v789
    %v791 = vlaneseq
    %v792 = vshrl.u32 %v791, 7
    %v793 = vsub.s32 %v790, %v792
    %v794 = vrot.slane %v780, %v793
    %v795 = vcombine.low %v696, %v708
    %v796 = vcombine.high %v696, %v708
    %v798 = vunpack.c.l.s4 1983009808
    %v799 = vunpack.c.0.s8 %v798
    %v800 = vlaneseq
    %v801 = vshrl.u32 %v800, 7
    %v802 = vsub.s32 %v799, %v801
    %v803 = vrot.slane %v795, %v802
    %v805 = vunpack.c.l.s4 1983009808
    %v806 = vunpack.c.0.s8 %v805
    %v807 = vlaneseq
    %v808 = vshrl.u32 %v807, 7
    %v809 = vsub.s32 %v806, %v808
    %v810 = vrot.slane %v796, %v809
    %v811 = vcombine.low %v787, %v803
    %v812 = vcombine.high %v787, %v803
    %v814 = vunpack.c.l.s4 1934713408
    %v815 = vunpack.c.0.s8 %v814
    %v816 = vlaneseq
    %v817 = vshrl.u32 %v816, 7
    %v818 = vsub.s32 %v815, %v817
    %v819 = vrot.slane %v811, %v818
    %v821 = vunpack.c.l.s4 1934713408
    %v822 = vunpack.c.0.s8 %v821
    %v823 = vlaneseq
    %v824 = vshrl.u32 %v823, 7
    %v825 = vsub.s32 %v822, %v824
    %v826 = vrot.slane %v812, %v825
    %v827 = vcombine.low %v794, %v810
    %v828 = vcombine.high %v794, %v810
    %v830 = vunpack.c.l.s4 1934713408
    %v831 = vunpack.c.0.s8 %v830
    %v832 = vlaneseq
    %v833 = vshrl.u32 %v832, 7
    %v834 = vsub.s32 %v831, %v833
    %v835 = vrot.slane %v827, %v834
    %v837 = vunpack.c.l.s4 1934713408
    %v838 = vunpack.c.0.s8 %v837
    %v839 = vlaneseq
    %v840 = vshrl.u32 %v839, 7
    %v841 = vsub.s32 %v838, %v840
    %v842 = vrot.slane %v828, %v841
    %v843 = vcombine.high %v819, 0.0
    %v844 = vcombine.high %v826, 0.0
    %v845 = vcombine.high %v835, 0.0
    %v846 = vcombine.high %v842, 0.0
    %v847 = vcombine.low %v751, %v758
    %v849 = vunpack.c.l.s4 1983009808
    %v850 = vunpack.c.0.s8 %v849
    %v851 = vlaneseq
    %v852 = vshrl.u32 %v851, 7
    %v853 = vsub.s32 %v850, %v852
    %v854 = vrot.slane %v847, %v853
    %v855 = vcombine.low %v775, %v776
    %v857 = vunpack.c.l.s4 1983009808
    %v858 = vunpack.c.0.s8 %v857
    %v859 = vlaneseq
    %v860 = vshrl.u32 %v859, 7
    %v861 = vsub.s32 %v858, %v860
    %v862 = vrot.slane %v855, %v861
    %v863 = vcombine.low %v767, %v774
    %v865 = vunpack.c.l.s4 1983009808
    %v866 = vunpack.c.0.s8 %v865
    %v867 = vlaneseq
    %v868 = vshrl.u32 %v867, 7
    %v869 = vsub.s32 %v866, %v868
    %v870 = vrot.slane %v863, %v869
    %v871 = vcombine.low %v777, %v778
    %v873 = vunpack.c.l.s4 1983009808
    %v874 = vunpack.c.0.s8 %v873
    %v875 = vlaneseq
    %v876 = vshrl.u32 %v875, 7
    %v877 = vsub.s32 %v874, %v876
    %v878 = vrot.slane %v871, %v877
    %v879 = vcombine.low %v854, %v862
    %v880 = vcombine.high %v854, %v862
    %v882 = vunpack.c.l.s4 1934713408
    %v883 = vunpack.c.0.s8 %v882
    %v884 = vlaneseq
    %v885 = vshrl.u32 %v884, 7
    %v886 = vsub.s32 %v883, %v885
    %v887 = vrot.slane %v879, %v886
    %v889 = vunpack.c.l.s4 1934713408
    %v890 = vunpack.c.0.s8 %v889
    %v891 = vlaneseq
    %v892 = vshrl.u32 %v891, 7
    %v893 = vsub.s32 %v890, %v892
    %v894 = vrot.slane %v880, %v893
    %v895 = vcombine.low %v870, %v878
    %v896 = vcombine.high %v870, %v878
    %v898 = vunpack.c.l.s4 1934713408
    %v899 = vunpack.c.0.s8 %v898
    %v900 = vlaneseq
    %v901 = vshrl.u32 %v900, 7
    %v902 = vsub.s32 %v899, %v901
    %v903 = vrot.slane %v895, %v902
    %v905 = vunpack.c.l.s4 1934713408
    %v906 = vunpack.c.0.s8 %v905
    %v907 = vlaneseq
    %v908 = vshrl.u32 %v907, 7
    %v909 = vsub.s32 %v906, %v908
    %v910 = vrot.slane %v896, %v909
    %v911 = vcombine.low %v887, %v903
    %v912 = vcombine.high %v887, %v903
    %v913 = vcombine.low %v894, %v910
    %v914 = vcombine.high %v894, %v910
    %v915 = vcombine.low %v819, %v826
    %v917 = vunpack.c.l.s4 1983009808
    %v918 = vunpack.c.0.s8 %v917
    %v919 = vlaneseq
    %v920 = vshrl.u32 %v919, 7
    %v921 = vsub.s32 %v918, %v920
    %v922 = vrot.slane %v915, %v921
    %v923 = vcombine.low %v843, %v844
    %v925 = vunpack.c.l.s4 1983009808
    %v926 = vunpack.c.0.s8 %v925
    %v927 = vlaneseq
    %v928 = vshrl.u32 %v927, 7
    %v929 = vsub.s32 %v926, %v928
    %v930 = vrot.slane %v923, %v929
    %v931 = vcombine.low %v835, %v842
    %v933 = vunpack.c.l.s4 1983009808
    %v934 = vunpack.c.0.s8 %v933
    %v935 = vlaneseq
    %v936 = vshrl.u32 %v935, 7
    %v937 = vsub.s32 %v934, %v936
    %v938 = vrot.slane %v931, %v937
    %v939 = vcombine.low %v845, %v846
    %v941 = vunpack.c.l.s4 1983009808
    %v942 = vunpack.c.0.s8 %v941
    %v943 = vlaneseq
    %v944 = vshrl.u32 %v943, 7
    %v945 = vsub.s32 %v942, %v944
    %v946 = vrot.slane %v939, %v945
    %v947 = vcombine.low %v922, %v930
    %v948 = vcombine.high %v922, %v930
    %v950 = vunpack.c.l.s4 1934713408
    %v951 = vunpack.c.0.s8 %v950
    %v952 = vlaneseq
    %v953 = vshrl.u32 %v952, 7
    %v954 = vsub.s32 %v951, %v953
    %v955 = vrot.slane %v947, %v954
    %v957 = vunpack.c.l.s4 1934713408
    %v958 = vunpack.c.0.s8 %v957
    %v959 = vlaneseq
    %v960 = vshrl.u32 %v959, 7
    %v961 = vsub.s32 %v958, %v960
    %v962 = vrot.slane %v948, %v961
    %v963 = vcombine.low %v938, %v946
    %v964 = vcombine.high %v938, %v946
    %v966 = vunpack.c.l.s4 1934713408
    %v967 = vunpack.c.0.s8 %v966
    %v968 = vlaneseq
    %v969 = vshrl.u32 %v968, 7
    %v970 = vsub.s32 %v967, %v969
    %v971 = vrot.slane %v963, %v970
    %v973 = vunpack.c.l.s4 1934713408
    %v974 = vunpack.c.0.s8 %v973
    %v975 = vlaneseq
    %v976 = vshrl.u32 %v975, 7
    %v977 = vsub.s32 %v974, %v976
    %v978 = vrot.slane %v964, %v977
    %v979 = vcombine.low %v955, %v971
    %v980 = vcombine.high %v955, %v971
    %v981 = vcombine.low %v962, %v978
    %v982 = vcombine.high %v962, %v978
    %v983 = vpack.c.bf16 %v911, %v911
    %v984 = vpack.c.bf16 %v979, %v979
    %v985 = vpack.c.bf16 %v912, %v912
    %v986 = vpack.c.bf16 %v980, %v980
    %v987 = vpack.c.bf16 %v913, %v913
    %v988 = vpack.c.bf16 %v981, %v981
    %v989 = vpack.c.bf16 %v914, %v914
    %v990 = vpack.c.bf16 %v982, %v982
    %993 = vrot.lane.b32.xlu0 %v385, 120
    %v994 = vpop.permute.xlu0 %993
    %995 = vrot.lane.b32.xlu0 %v388, 120
    %v996 = vpop.permute.xlu0 %995
    %999 = vrot.lane.b32.xlu0 %v385, 112
    %v1000 = vpop.permute.xlu0 %999
    %1001 = vrot.lane.b32.xlu0 %v388, 112
    %v1002 = vpop.permute.xlu0 %1001
    %1005 = vrot.lane.b32.xlu0 %v385, 104
    %v1006 = vpop.permute.xlu0 %1005
    %1007 = vrot.lane.b32.xlu0 %v388, 104
    %v1008 = vpop.permute.xlu0 %1007
    %v1011 = vcombine.low %v385, %v1000
    %v1012 = vcombine.high %v385, %v1000
    %v1014 = vunpack.c.l.s4 1983009808
    %v1015 = vunpack.c.0.s8 %v1014
    %v1016 = vlaneseq
    %v1017 = vshrl.u32 %v1016, 7
    %v1018 = vsub.s32 %v1015, %v1017
    %v1019 = vrot.slane %v1011, %v1018
    %v1021 = vunpack.c.l.s4 1983009808
    %v1022 = vunpack.c.0.s8 %v1021
    %v1023 = vlaneseq
    %v1024 = vshrl.u32 %v1023, 7
    %v1025 = vsub.s32 %v1022, %v1024
    %v1026 = vrot.slane %v1012, %v1025
    %v1027 = vcombine.low %v994, %v1006
    %v1028 = vcombine.high %v994, %v1006
    %v1030 = vunpack.c.l.s4 1983009808
    %v1031 = vunpack.c.0.s8 %v1030
    %v1032 = vlaneseq
    %v1033 = vshrl.u32 %v1032, 7
    %v1034 = vsub.s32 %v1031, %v1033
    %v1035 = vrot.slane %v1027, %v1034
    %v1037 = vunpack.c.l.s4 1983009808
    %v1038 = vunpack.c.0.s8 %v1037
    %v1039 = vlaneseq
    %v1040 = vshrl.u32 %v1039, 7
    %v1041 = vsub.s32 %v1038, %v1040
    %v1042 = vrot.slane %v1028, %v1041
    %v1043 = vcombine.low %v1019, %v1035
    %v1044 = vcombine.high %v1019, %v1035
    %v1046 = vunpack.c.l.s4 1934713408
    %v1047 = vunpack.c.0.s8 %v1046
    %v1048 = vlaneseq
    %v1049 = vshrl.u32 %v1048, 7
    %v1050 = vsub.s32 %v1047, %v1049
    %v1051 = vrot.slane %v1043, %v1050
    %v1053 = vunpack.c.l.s4 1934713408
    %v1054 = vunpack.c.0.s8 %v1053
    %v1055 = vlaneseq
    %v1056 = vshrl.u32 %v1055, 7
    %v1057 = vsub.s32 %v1054, %v1056
    %v1058 = vrot.slane %v1044, %v1057
    %v1059 = vcombine.low %v1026, %v1042
    %v1060 = vcombine.high %v1026, %v1042
    %v1062 = vunpack.c.l.s4 1934713408
    %v1063 = vunpack.c.0.s8 %v1062
    %v1064 = vlaneseq
    %v1065 = vshrl.u32 %v1064, 7
    %v1066 = vsub.s32 %v1063, %v1065
    %v1067 = vrot.slane %v1059, %v1066
    %v1069 = vunpack.c.l.s4 1934713408
    %v1070 = vunpack.c.0.s8 %v1069
    %v1071 = vlaneseq
    %v1072 = vshrl.u32 %v1071, 7
    %v1073 = vsub.s32 %v1070, %v1072
    %v1074 = vrot.slane %v1060, %v1073
    %v1075 = vcombine.high %v1051, 0.0
    %v1076 = vcombine.high %v1058, 0.0
    %v1077 = vcombine.high %v1067, 0.0
    %v1078 = vcombine.high %v1074, 0.0
    %v1079 = vcombine.low %v388, %v1002
    %v1080 = vcombine.high %v388, %v1002
    %v1082 = vunpack.c.l.s4 1983009808
    %v1083 = vunpack.c.0.s8 %v1082
    %v1084 = vlaneseq
    %v1085 = vshrl.u32 %v1084, 7
    %v1086 = vsub.s32 %v1083, %v1085
    %v1087 = vrot.slane %v1079, %v1086
    %v1089 = vunpack.c.l.s4 1983009808
    %v1090 = vunpack.c.0.s8 %v1089
    %v1091 = vlaneseq
    %v1092 = vshrl.u32 %v1091, 7
    %v1093 = vsub.s32 %v1090, %v1092
    %v1094 = vrot.slane %v1080, %v1093
    %v1095 = vcombine.low %v996, %v1008
    %v1096 = vcombine.high %v996, %v1008
    %v1098 = vunpack.c.l.s4 1983009808
    %v1099 = vunpack.c.0.s8 %v1098
    %v1100 = vlaneseq
    %v1101 = vshrl.u32 %v1100, 7
    %v1102 = vsub.s32 %v1099, %v1101
    %v1103 = vrot.slane %v1095, %v1102
    %v1105 = vunpack.c.l.s4 1983009808
    %v1106 = vunpack.c.0.s8 %v1105
    %v1107 = vlaneseq
    %v1108 = vshrl.u32 %v1107, 7
    %v1109 = vsub.s32 %v1106, %v1108
    %v1110 = vrot.slane %v1096, %v1109
    %v1111 = vcombine.low %v1087, %v1103
    %v1112 = vcombine.high %v1087, %v1103
    %v1114 = vunpack.c.l.s4 1934713408
    %v1115 = vunpack.c.0.s8 %v1114
    %v1116 = vlaneseq
    %v1117 = vshrl.u32 %v1116, 7
    %v1118 = vsub.s32 %v1115, %v1117
    %v1119 = vrot.slane %v1111, %v1118
    %v1121 = vunpack.c.l.s4 1934713408
    %v1122 = vunpack.c.0.s8 %v1121
    %v1123 = vlaneseq
    %v1124 = vshrl.u32 %v1123, 7
    %v1125 = vsub.s32 %v1122, %v1124
    %v1126 = vrot.slane %v1112, %v1125
    %v1127 = vcombine.low %v1094, %v1110
    %v1128 = vcombine.high %v1094, %v1110
    %v1130 = vunpack.c.l.s4 1934713408
    %v1131 = vunpack.c.0.s8 %v1130
    %v1132 = vlaneseq
    %v1133 = vshrl.u32 %v1132, 7
    %v1134 = vsub.s32 %v1131, %v1133
    %v1135 = vrot.slane %v1127, %v1134
    %v1137 = vunpack.c.l.s4 1934713408
    %v1138 = vunpack.c.0.s8 %v1137
    %v1139 = vlaneseq
    %v1140 = vshrl.u32 %v1139, 7
    %v1141 = vsub.s32 %v1138, %v1140
    %v1142 = vrot.slane %v1128, %v1141
    %v1143 = vcombine.high %v1119, 0.0
    %v1144 = vcombine.high %v1126, 0.0
    %v1145 = vcombine.high %v1135, 0.0
    %v1146 = vcombine.high %v1142, 0.0
    %v1147 = vcombine.low %v1051, %v1058
    %v1149 = vunpack.c.l.s4 1983009808
    %v1150 = vunpack.c.0.s8 %v1149
    %v1151 = vlaneseq
    %v1152 = vshrl.u32 %v1151, 7
    %v1153 = vsub.s32 %v1150, %v1152
    %v1154 = vrot.slane %v1147, %v1153
    %v1155 = vcombine.low %v1075, %v1076
    %v1157 = vunpack.c.l.s4 1983009808
    %v1158 = vunpack.c.0.s8 %v1157
    %v1159 = vlaneseq
    %v1160 = vshrl.u32 %v1159, 7
    %v1161 = vsub.s32 %v1158, %v1160
    %v1162 = vrot.slane %v1155, %v1161
    %v1163 = vcombine.low %v1067, %v1074
    %v1165 = vunpack.c.l.s4 1983009808
    %v1166 = vunpack.c.0.s8 %v1165
    %v1167 = vlaneseq
    %v1168 = vshrl.u32 %v1167, 7
    %v1169 = vsub.s32 %v1166, %v1168
    %v1170 = vrot.slane %v1163, %v1169
    %v1171 = vcombine.low %v1077, %v1078
    %v1173 = vunpack.c.l.s4 1983009808
    %v1174 = vunpack.c.0.s8 %v1173
    %v1175 = vlaneseq
    %v1176 = vshrl.u32 %v1175, 7
    %v1177 = vsub.s32 %v1174, %v1176
    %v1178 = vrot.slane %v1171, %v1177
    %v1179 = vcombine.low %v1154, %v1162
    %v1180 = vcombine.high %v1154, %v1162
    %v1182 = vunpack.c.l.s4 1934713408
    %v1183 = vunpack.c.0.s8 %v1182
    %v1184 = vlaneseq
    %v1185 = vshrl.u32 %v1184, 7
    %v1186 = vsub.s32 %v1183, %v1185
    %v1187 = vrot.slane %v1179, %v1186
    %v1189 = vunpack.c.l.s4 1934713408
    %v1190 = vunpack.c.0.s8 %v1189
    %v1191 = vlaneseq
    %v1192 = vshrl.u32 %v1191, 7
    %v1193 = vsub.s32 %v1190, %v1192
    %v1194 = vrot.slane %v1180, %v1193
    %v1195 = vcombine.low %v1170, %v1178
    %v1196 = vcombine.high %v1170, %v1178
    %v1198 = vunpack.c.l.s4 1934713408
    %v1199 = vunpack.c.0.s8 %v1198
    %v1200 = vlaneseq
    %v1201 = vshrl.u32 %v1200, 7
    %v1202 = vsub.s32 %v1199, %v1201
    %v1203 = vrot.slane %v1195, %v1202
    %v1205 = vunpack.c.l.s4 1934713408
    %v1206 = vunpack.c.0.s8 %v1205
    %v1207 = vlaneseq
    %v1208 = vshrl.u32 %v1207, 7
    %v1209 = vsub.s32 %v1206, %v1208
    %v1210 = vrot.slane %v1196, %v1209
    %v1211 = vcombine.low %v1187, %v1203
    %v1212 = vcombine.high %v1187, %v1203
    %v1213 = vcombine.low %v1194, %v1210
    %v1214 = vcombine.high %v1194, %v1210
    %v1215 = vcombine.low %v1119, %v1126
    %v1217 = vunpack.c.l.s4 1983009808
    %v1218 = vunpack.c.0.s8 %v1217
    %v1219 = vlaneseq
    %v1220 = vshrl.u32 %v1219, 7
    %v1221 = vsub.s32 %v1218, %v1220
    %v1222 = vrot.slane %v1215, %v1221
    %v1223 = vcombine.low %v1143, %v1144
    %v1225 = vunpack.c.l.s4 1983009808
    %v1226 = vunpack.c.0.s8 %v1225
    %v1227 = vlaneseq
    %v1228 = vshrl.u32 %v1227, 7
    %v1229 = vsub.s32 %v1226, %v1228
    %v1230 = vrot.slane %v1223, %v1229
    %v1231 = vcombine.low %v1135, %v1142
    %v1233 = vunpack.c.l.s4 1983009808
    %v1234 = vunpack.c.0.s8 %v1233
    %v1235 = vlaneseq
    %v1236 = vshrl.u32 %v1235, 7
    %v1237 = vsub.s32 %v1234, %v1236
    %v1238 = vrot.slane %v1231, %v1237
    %v1239 = vcombine.low %v1145, %v1146
    %v1241 = vunpack.c.l.s4 1983009808
    %v1242 = vunpack.c.0.s8 %v1241
    %v1243 = vlaneseq
    %v1244 = vshrl.u32 %v1243, 7
    %v1245 = vsub.s32 %v1242, %v1244
    %v1246 = vrot.slane %v1239, %v1245
    %v1247 = vcombine.low %v1222, %v1230
    %v1248 = vcombine.high %v1222, %v1230
    %v1250 = vunpack.c.l.s4 1934713408
    %v1251 = vunpack.c.0.s8 %v1250
    %v1252 = vlaneseq
    %v1253 = vshrl.u32 %v1252, 7
    %v1254 = vsub.s32 %v1251, %v1253
    %v1255 = vrot.slane %v1247, %v1254
    %v1257 = vunpack.c.l.s4 1934713408
    %v1258 = vunpack.c.0.s8 %v1257
    %v1259 = vlaneseq
    %v1260 = vshrl.u32 %v1259, 7
    %v1261 = vsub.s32 %v1258, %v1260
    %v1262 = vrot.slane %v1248, %v1261
    %v1263 = vcombine.low %v1238, %v1246
    %v1264 = vcombine.high %v1238, %v1246
    %v1266 = vunpack.c.l.s4 1934713408
    %v1267 = vunpack.c.0.s8 %v1266
    %v1268 = vlaneseq
    %v1269 = vshrl.u32 %v1268, 7
    %v1270 = vsub.s32 %v1267, %v1269
    %v1271 = vrot.slane %v1263, %v1270
    %v1273 = vunpack.c.l.s4 1934713408
    %v1274 = vunpack.c.0.s8 %v1273
    %v1275 = vlaneseq
    %v1276 = vshrl.u32 %v1275, 7
    %v1277 = vsub.s32 %v1274, %v1276
    %v1278 = vrot.slane %v1264, %v1277
    %v1279 = vcombine.low %v1255, %v1271
    %v1280 = vcombine.high %v1255, %v1271
    %v1281 = vcombine.low %v1262, %v1278
    %v1282 = vcombine.high %v1262, %v1278
    %v1283 = vpack.c.bf16 %v1211, %v1211
    %v1284 = vpack.c.bf16 %v1279, %v1279
    %v1285 = vpack.c.bf16 %v1212, %v1212
    %v1286 = vpack.c.bf16 %v1280, %v1280
    %v1287 = vpack.c.bf16 %v1213, %v1213
    %v1288 = vpack.c.bf16 %v1281, %v1281
    %v1289 = vpack.c.bf16 %v1214, %v1214
    %v1290 = vpack.c.bf16 %v1282, %v1282
    %vm1291 = vcmask 64512
    %v1293 = vsel %vm1291, %v683, 0
    %v1296 = vsel %vm1291, %v983, 0
    %1298 = vmatprep.subr.bf16.mxu0 0
    %1299 = vmatpush1.bf16.xpose.msra.mxu0 %v1296
    %1300 = vmatprep.subr.bf16.mxu0 0
    %1301 = vmatpush1.bf16.xpose.msra.mxu0 0
    %1302 = vmatprep.subr.bf16.mxu0 0
    %1303 = vmatpush1.bf16.xpose.msra.mxu0 0
    %1304 = vmatprep.subr.bf16.mxu0 0
    %1305 = vmatpush1.bf16.xpose.msra.mxu0 0
    %1306 = vmatprep.subr.bf16.mxu0 0
    %1307 = vmatpush1.bf16.xpose.msra.mxu0 0
    %1308 = vmatprep.subr.bf16.mxu0 0
    %1309 = vmatpush1.bf16.xpose.msra.mxu0 0
    %1310 = vmatprep.subr.bf16.mxu0 0
    %1311 = vmatpush1.bf16.xpose.msra.mxu0 0
    %1312 = vmatprep.subr.bf16.mxu0 0
    %1313 = vmatpush1.bf16.xpose.msra.mxu0 0
    %1314 = vmatprep.subr.bf16.mxu0 0
    %1315 = vmatpush1.bf16.xpose.msra.mxu0 0
    %1316 = vmatprep.subr.bf16.mxu0 0
    %1317 = vmatpush1.bf16.xpose.msra.mxu0 0
    %1318 = vmatprep.subr.bf16.mxu0 0
    %1319 = vmatpush1.bf16.xpose.msra.mxu0 0
    %1320 = vmatprep.subr.bf16.mxu0 0
    %1321 = vmatpush1.bf16.xpose.msra.mxu0 0
    %1322 = vmatprep.subr.bf16.mxu0 0
    %1323 = vmatpush1.bf16.xpose.msra.mxu0 0
    %1324 = vmatprep.subr.bf16.mxu0 0
    %1325 = vmatpush1.bf16.xpose.msra.mxu0 0
    %1326 = vmatprep.subr.bf16.mxu0 0
    %1327 = vmatpush1.bf16.xpose.msra.mxu0 0
    %1328 = vmatprep.subr.bf16.mxu0 0
    %1329 = vmatpush1.bf16.xpose.msra.mxu0 0
    %1330 = vmatprep.mubr.bf16.mxu0 0
    %1331 = vmatmul.mubr.bf16.gmra.mrb[0].mxu0 %v1293
    %v1332 = vpop.f32.mrb[0].mxu0
    %v1333 = vadd.f32 0.0, %v1332
    %v1334 = vpop.f32.mrb[0].mxu0
    %v1335 = vpop.f32.mrb[0].mxu0
    %v1336 = vpop.f32.mrb[0].mxu0
    %1337 = vdwg.mxu0
    %v1339 = vsel %vm1291, %v684, 0
    %v1342 = vsel %vm1291, %v984, 0
    %1344 = vmatprep.subr.bf16.mxu0 0
    %1345 = vmatpush1.bf16.xpose.msra.mxu0 %v1342
    %1346 = vmatprep.subr.bf16.mxu0 0
    %1347 = vmatpush1.bf16.xpose.msra.mxu0 0
    %1348 = vmatprep.subr.bf16.mxu0 0
    %1349 = vmatpush1.bf16.xpose.msra.mxu0 0
    %1350 = vmatprep.subr.bf16.mxu0 0
    %1351 = vmatpush1.bf16.xpose.msra.mxu0 0
    %1352 = vmatprep.subr.bf16.mxu0 0
    %1353 = vmatpush1.bf16.xpose.msra.mxu0 0
    %1354 = vmatprep.subr.bf16.mxu0 0
    %1355 = vmatpush1.bf16.xpose.msra.mxu0 0
    %1356 = vmatprep.subr.bf16.mxu0 0
    %1357 = vmatpush1.bf16.xpose.msra.mxu0 0
    %1358 = vmatprep.subr.bf16.mxu0 0
    %1359 = vmatpush1.bf16.xpose.msra.mxu0 0
    %1360 = vmatprep.subr.bf16.mxu0 0
    %1361 = vmatpush1.bf16.xpose.msra.mxu0 0
    %1362 = vmatprep.subr.bf16.mxu0 0
    %1363 = vmatpush1.bf16.xpose.msra.mxu0 0
    %1364 = vmatprep.subr.bf16.mxu0 0
    %1365 = vmatpush1.bf16.xpose.msra.mxu0 0
    %1366 = vmatprep.subr.bf16.mxu0 0
    %1367 = vmatpush1.bf16.xpose.msra.mxu0 0
    %1368 = vmatprep.subr.bf16.mxu0 0
    %1369 = vmatpush1.bf16.xpose.msra.mxu0 0
    %1370 = vmatprep.subr.bf16.mxu0 0
    %1371 = vmatpush1.bf16.xpose.msra.mxu0 0
    %1372 = vmatprep.subr.bf16.mxu0 0
    %1373 = vmatpush1.bf16.xpose.msra.mxu0 0
    %1374 = vmatprep.subr.bf16.mxu0 0
    %1375 = vmatpush1.bf16.xpose.msra.mxu0 0
    %1376 = vmatprep.mubr.bf16.mxu0 0
    %1377 = vmatmul.mubr.bf16.gmra.mrb[0].mxu0 %v1339
    %v1378 = vpop.f32.mrb[0].mxu0
    %v1379 = vadd.f32 0.0, %v1378
    %v1380 = vpop.f32.mrb[0].mxu0
    %v1381 = vpop.f32.mrb[0].mxu0
    %v1382 = vpop.f32.mrb[0].mxu0
    %1383 = vdwg.mxu0
    %v1385 = vsel %vm1291, %v685, 0
    %v1388 = vsel %vm1291, %v985, 0
    %1390 = vmatprep.subr.bf16.mxu0 0
    %1391 = vmatpush1.bf16.xpose.msra.mxu0 %v1388
    %1392 = vmatprep.subr.bf16.mxu0 0
    %1393 = vmatpush1.bf16.xpose.msra.mxu0 0
    %1394 = vmatprep.subr.bf16.mxu0 0
    %1395 = vmatpush1.bf16.xpose.msra.mxu0 0
    %1396 = vmatprep.subr.bf16.mxu0 0
    %1397 = vmatpush1.bf16.xpose.msra.mxu0 0
    %1398 = vmatprep.subr.bf16.mxu0 0
    %1399 = vmatpush1.bf16.xpose.msra.mxu0 0
    %1400 = vmatprep.subr.bf16.mxu0 0
    %1401 = vmatpush1.bf16.xpose.msra.mxu0 0
    %1402 = vmatprep.subr.bf16.mxu0 0
    %1403 = vmatpush1.bf16.xpose.msra.mxu0 0
    %1404 = vmatprep.subr.bf16.mxu0 0
    %1405 = vmatpush1.bf16.xpose.msra.mxu0 0
    %1406 = vmatprep.subr.bf16.mxu0 0
    %1407 = vmatpush1.bf16.xpose.msra.mxu0 0
    %1408 = vmatprep.subr.bf16.mxu0 0
    %1409 = vmatpush1.bf16.xpose.msra.mxu0 0
    %1410 = vmatprep.subr.bf16.mxu0 0
    %1411 = vmatpush1.bf16.xpose.msra.mxu0 0
    %1412 = vmatprep.subr.bf16.mxu0 0
    %1413 = vmatpush1.bf16.xpose.msra.mxu0 0
    %1414 = vmatprep.subr.bf16.mxu0 0
    %1415 = vmatpush1.bf16.xpose.msra.mxu0 0
    %1416 = vmatprep.subr.bf16.mxu0 0
    %1417 = vmatpush1.bf16.xpose.msra.mxu0 0
    %1418 = vmatprep.subr.bf16.mxu0 0
    %1419 = vmatpush1.bf16.xpose.msra.mxu0 0
    %1420 = vmatprep.subr.bf16.mxu0 0
    %1421 = vmatpush1.bf16.xpose.msra.mxu0 0
    %1422 = vmatprep.mubr.bf16.mxu0 0
    %1423 = vmatmul.mubr.bf16.gmra.mrb[0].mxu0 %v1385
    %v1424 = vpop.f32.mrb[0].mxu0
    %v1425 = vadd.f32 0.0, %v1424
    %v1426 = vpop.f32.mrb[0].mxu0
    %v1427 = vpop.f32.mrb[0].mxu0
    %v1428 = vpop.f32.mrb[0].mxu0
    %1429 = vdwg.mxu0
    %v1431 = vsel %vm1291, %v686, 0
    %v1434 = vsel %vm1291, %v986, 0
    %1436 = vmatprep.subr.bf16.mxu0 0
    %1437 = vmatpush1.bf16.xpose.msra.mxu0 %v1434
    %1438 = vmatprep.subr.bf16.mxu0 0
    %1439 = vmatpush1.bf16.xpose.msra.mxu0 0
    %1440 = vmatprep.subr.bf16.mxu0 0
    %1441 = vmatpush1.bf16.xpose.msra.mxu0 0
    %1442 = vmatprep.subr.bf16.mxu0 0
    %1443 = vmatpush1.bf16.xpose.msra.mxu0 0
    %1444 = vmatprep.subr.bf16.mxu0 0
    %1445 = vmatpush1.bf16.xpose.msra.mxu0 0
    %1446 = vmatprep.subr.bf16.mxu0 0
    %1447 = vmatpush1.bf16.xpose.msra.mxu0 0
    %1448 = vmatprep.subr.bf16.mxu0 0
    %1449 = vmatpush1.bf16.xpose.msra.mxu0 0
    %1450 = vmatprep.subr.bf16.mxu0 0
    %1451 = vmatpush1.bf16.xpose.msra.mxu0 0
    %1452 = vmatprep.subr.bf16.mxu0 0
    %1453 = vmatpush1.bf16.xpose.msra.mxu0 0
    %1454 = vmatprep.subr.bf16.mxu0 0
    %1455 = vmatpush1.bf16.xpose.msra.mxu0 0
    %1456 = vmatprep.subr.bf16.mxu0 0
    %1457 = vmatpush1.bf16.xpose.msra.mxu0 0
    %1458 = vmatprep.subr.bf16.mxu0 0
    %1459 = vmatpush1.bf16.xpose.msra.mxu0 0
    %1460 = vmatprep.subr.bf16.mxu0 0
    %1461 = vmatpush1.bf16.xpose.msra.mxu0 0
    %1462 = vmatprep.subr.bf16.mxu0 0
    %1463 = vmatpush1.bf16.xpose.msra.mxu0 0
    %1464 = vmatprep.subr.bf16.mxu0 0
    %1465 = vmatpush1.bf16.xpose.msra.mxu0 0
    %1466 = vmatprep.subr.bf16.mxu0 0
    %1467 = vmatpush1.bf16.xpose.msra.mxu0 0
    %1468 = vmatprep.mubr.bf16.mxu0 0
    %1469 = vmatmul.mubr.bf16.gmra.mrb[0].mxu0 %v1431
    %v1470 = vpop.f32.mrb[0].mxu0
    %v1471 = vadd.f32 0.0, %v1470
    %v1472 = vpop.f32.mrb[0].mxu0
    %v1473 = vpop.f32.mrb[0].mxu0
    %v1474 = vpop.f32.mrb[0].mxu0
    %1475 = vdwg.mxu0
    %v1477 = vsel %vm1291, %v687, 0
    %v1480 = vsel %vm1291, %v987, 0
    %1482 = vmatprep.subr.bf16.mxu0 0
    %1483 = vmatpush1.bf16.xpose.msra.mxu0 %v1480
    %1484 = vmatprep.subr.bf16.mxu0 0
    %1485 = vmatpush1.bf16.xpose.msra.mxu0 0
    %1486 = vmatprep.subr.bf16.mxu0 0
    %1487 = vmatpush1.bf16.xpose.msra.mxu0 0
    %1488 = vmatprep.subr.bf16.mxu0 0
    %1489 = vmatpush1.bf16.xpose.msra.mxu0 0
    %1490 = vmatprep.subr.bf16.mxu0 0
    %1491 = vmatpush1.bf16.xpose.msra.mxu0 0
    %1492 = vmatprep.subr.bf16.mxu0 0
    %1493 = vmatpush1.bf16.xpose.msra.mxu0 0
    %1494 = vmatprep.subr.bf16.mxu0 0
    %1495 = vmatpush1.bf16.xpose.msra.mxu0 0
    %1496 = vmatprep.subr.bf16.mxu0 0
    %1497 = vmatpush1.bf16.xpose.msra.mxu0 0
    %1498 = vmatprep.subr.bf16.mxu0 0
    %1499 = vmatpush1.bf16.xpose.msra.mxu0 0
    %1500 = vmatprep.subr.bf16.mxu0 0
    %1501 = vmatpush1.bf16.xpose.msra.mxu0 0
    %1502 = vmatprep.subr.bf16.mxu0 0
    %1503 = vmatpush1.bf16.xpose.msra.mxu0 0
    %1504 = vmatprep.subr.bf16.mxu0 0
    %1505 = vmatpush1.bf16.xpose.msra.mxu0 0
    %1506 = vmatprep.subr.bf16.mxu0 0
    %1507 = vmatpush1.bf16.xpose.msra.mxu0 0
    %1508 = vmatprep.subr.bf16.mxu0 0
    %1509 = vmatpush1.bf16.xpose.msra.mxu0 0
    %1510 = vmatprep.subr.bf16.mxu0 0
    %1511 = vmatpush1.bf16.xpose.msra.mxu0 0
    %1512 = vmatprep.subr.bf16.mxu0 0
    %1513 = vmatpush1.bf16.xpose.msra.mxu0 0
    %1514 = vmatprep.mubr.bf16.mxu0 0
    %1515 = vmatmul.mubr.bf16.gmra.mrb[0].mxu0 %v1477
    %v1516 = vpop.f32.mrb[0].mxu0
    %v1517 = vadd.f32 0.0, %v1516
    %v1518 = vpop.f32.mrb[0].mxu0
    %v1519 = vpop.f32.mrb[0].mxu0
    %v1520 = vpop.f32.mrb[0].mxu0
    %1521 = vdwg.mxu0
    %v1523 = vsel %vm1291, %v688, 0
    %v1526 = vsel %vm1291, %v988, 0
    %1528 = vmatprep.subr.bf16.mxu0 0
    %1529 = vmatpush1.bf16.xpose.msra.mxu0 %v1526
    %1530 = vmatprep.subr.bf16.mxu0 0
    %1531 = vmatpush1.bf16.xpose.msra.mxu0 0
    %1532 = vmatprep.subr.bf16.mxu0 0
    %1533 = vmatpush1.bf16.xpose.msra.mxu0 0
    %1534 = vmatprep.subr.bf16.mxu0 0
    %1535 = vmatpush1.bf16.xpose.msra.mxu0 0
    %1536 = vmatprep.subr.bf16.mxu0 0
    %1537 = vmatpush1.bf16.xpose.msra.mxu0 0
    %1538 = vmatprep.subr.bf16.mxu0 0
    %1539 = vmatpush1.bf16.xpose.msra.mxu0 0
    %1540 = vmatprep.subr.bf16.mxu0 0
    %1541 = vmatpush1.bf16.xpose.msra.mxu0 0
    %1542 = vmatprep.subr.bf16.mxu0 0
    %1543 = vmatpush1.bf16.xpose.msra.mxu0 0
    %1544 = vmatprep.subr.bf16.mxu0 0
    %1545 = vmatpush1.bf16.xpose.msra.mxu0 0
    %1546 = vmatprep.subr.bf16.mxu0 0
    %1547 = vmatpush1.bf16.xpose.msra.mxu0 0
    %1548 = vmatprep.subr.bf16.mxu0 0
    %1549 = vmatpush1.bf16.xpose.msra.mxu0 0
    %1550 = vmatprep.subr.bf16.mxu0 0
    %1551 = vmatpush1.bf16.xpose.msra.mxu0 0
    %1552 = vmatprep.subr.bf16.mxu0 0
    %1553 = vmatpush1.bf16.xpose.msra.mxu0 0
    %1554 = vmatprep.subr.bf16.mxu0 0
    %1555 = vmatpush1.bf16.xpose.msra.mxu0 0
    %1556 = vmatprep.subr.bf16.mxu0 0
    %1557 = vmatpush1.bf16.xpose.msra.mxu0 0
    %1558 = vmatprep.subr.bf16.mxu0 0
    %1559 = vmatpush1.bf16.xpose.msra.mxu0 0
    %1560 = vmatprep.mubr.bf16.mxu0 0
    %1561 = vmatmul.mubr.bf16.gmra.mrb[0].mxu0 %v1523
    %v1562 = vpop.f32.mrb[0].mxu0
    %v1563 = vadd.f32 0.0, %v1562
    %v1564 = vpop.f32.mrb[0].mxu0
    %v1565 = vpop.f32.mrb[0].mxu0
    %v1566 = vpop.f32.mrb[0].mxu0
    %1567 = vdwg.mxu0
    %v1569 = vsel %vm1291, %v689, 0
    %v1572 = vsel %vm1291, %v989, 0
    %1574 = vmatprep.subr.bf16.mxu0 0
    %1575 = vmatpush1.bf16.xpose.msra.mxu0 %v1572
    %1576 = vmatprep.subr.bf16.mxu0 0
    %1577 = vmatpush1.bf16.xpose.msra.mxu0 0
    %1578 = vmatprep.subr.bf16.mxu0 0
    %1579 = vmatpush1.bf16.xpose.msra.mxu0 0
    %1580 = vmatprep.subr.bf16.mxu0 0
    %1581 = vmatpush1.bf16.xpose.msra.mxu0 0
    %1582 = vmatprep.subr.bf16.mxu0 0
    %1583 = vmatpush1.bf16.xpose.msra.mxu0 0
    %1584 = vmatprep.subr.bf16.mxu0 0
    %1585 = vmatpush1.bf16.xpose.msra.mxu0 0
    %1586 = vmatprep.subr.bf16.mxu0 0
    %1587 = vmatpush1.bf16.xpose.msra.mxu0 0
    %1588 = vmatprep.subr.bf16.mxu0 0
    %1589 = vmatpush1.bf16.xpose.msra.mxu0 0
    %1590 = vmatprep.subr.bf16.mxu0 0
    %1591 = vmatpush1.bf16.xpose.msra.mxu0 0
    %1592 = vmatprep.subr.bf16.mxu0 0
    %1593 = vmatpush1.bf16.xpose.msra.mxu0 0
    %1594 = vmatprep.subr.bf16.mxu0 0
    %1595 = vmatpush1.bf16.xpose.msra.mxu0 0
    %1596 = vmatprep.subr.bf16.mxu0 0
    %1597 = vmatpush1.bf16.xpose.msra.mxu0 0
    %1598 = vmatprep.subr.bf16.mxu0 0
    %1599 = vmatpush1.bf16.xpose.msra.mxu0 0
    %1600 = vmatprep.subr.bf16.mxu0 0
    %1601 = vmatpush1.bf16.xpose.msra.mxu0 0
    %1602 = vmatprep.subr.bf16.mxu0 0
    %1603 = vmatpush1.bf16.xpose.msra.mxu0 0
    %1604 = vmatprep.subr.bf16.mxu0 0
    %1605 = vmatpush1.bf16.xpose.msra.mxu0 0
    %1606 = vmatprep.mubr.bf16.mxu0 0
    %1607 = vmatmul.mubr.bf16.gmra.mrb[0].mxu0 %v1569
    %v1608 = vpop.f32.mrb[0].mxu0
    %v1609 = vadd.f32 0.0, %v1608
    %v1610 = vpop.f32.mrb[0].mxu0
    %v1611 = vpop.f32.mrb[0].mxu0
    %v1612 = vpop.f32.mrb[0].mxu0
    %1613 = vdwg.mxu0
    %v1615 = vsel %vm1291, %v690, 0
    %v1618 = vsel %vm1291, %v990, 0
    %1620 = vmatprep.subr.bf16.mxu0 0
    %1621 = vmatpush1.bf16.xpose.msra.mxu0 %v1618
    %1622 = vmatprep.subr.bf16.mxu0 0
    %1623 = vmatpush1.bf16.xpose.msra.mxu0 0
    %1624 = vmatprep.subr.bf16.mxu0 0
    %1625 = vmatpush1.bf16.xpose.msra.mxu0 0
    %1626 = vmatprep.subr.bf16.mxu0 0
    %1627 = vmatpush1.bf16.xpose.msra.mxu0 0
    %1628 = vmatprep.subr.bf16.mxu0 0
    %1629 = vmatpush1.bf16.xpose.msra.mxu0 0
    %1630 = vmatprep.subr.bf16.mxu0 0
    %1631 = vmatpush1.bf16.xpose.msra.mxu0 0
    %1632 = vmatprep.subr.bf16.mxu0 0
    %1633 = vmatpush1.bf16.xpose.msra.mxu0 0
    %1634 = vmatprep.subr.bf16.mxu0 0
    %1635 = vmatpush1.bf16.xpose.msra.mxu0 0
    %1636 = vmatprep.subr.bf16.mxu0 0
    %1637 = vmatpush1.bf16.xpose.msra.mxu0 0
    %1638 = vmatprep.subr.bf16.mxu0 0
    %1639 = vmatpush1.bf16.xpose.msra.mxu0 0
    %1640 = vmatprep.subr.bf16.mxu0 0
    %1641 = vmatpush1.bf16.xpose.msra.mxu0 0
    %1642 = vmatprep.subr.bf16.mxu0 0
    %1643 = vmatpush1.bf16.xpose.msra.mxu0 0
    %1644 = vmatprep.subr.bf16.mxu0 0
    %1645 = vmatpush1.bf16.xpose.msra.mxu0 0
    %1646 = vmatprep.subr.bf16.mxu0 0
    %1647 = vmatpush1.bf16.xpose.msra.mxu0 0
    %1648 = vmatprep.subr.bf16.mxu0 0
    %1649 = vmatpush1.bf16.xpose.msra.mxu0 0
    %1650 = vmatprep.subr.bf16.mxu0 0
    %1651 = vmatpush1.bf16.xpose.msra.mxu0 0
    %1652 = vmatprep.mubr.bf16.mxu0 0
    %1653 = vmatmul.mubr.bf16.gmra.mrb[0].mxu0 %v1615
    %v1654 = vpop.f32.mrb[0].mxu0
    %v1655 = vadd.f32 0.0, %v1654
    %v1656 = vpop.f32.mrb[0].mxu0
    %v1657 = vpop.f32.mrb[0].mxu0
    %v1658 = vpop.f32.mrb[0].mxu0
    %1659 = vdwg.mxu0
    %v1660 = vsel %vm1291, %v1333, -inf
    %1661 = vmax.xlane.f32.xlu0 %v1660
    %v1662 = vpop.xlane.xlu0 %1661
    %v1663 = vsel %vm1291, %v1379, -inf
    %1664 = vmax.xlane.f32.xlu0 %v1663
    %v1665 = vpop.xlane.xlu0 %1664
    %v1666 = vsel %vm1291, %v1425, -inf
    %1667 = vmax.xlane.f32.xlu0 %v1666
    %v1668 = vpop.xlane.xlu0 %1667
    %v1669 = vsel %vm1291, %v1471, -inf
    %1670 = vmax.xlane.f32.xlu0 %v1669
    %v1671 = vpop.xlane.xlu0 %1670
    %v1672 = vsel %vm1291, %v1517, -inf
    %1673 = vmax.xlane.f32.xlu0 %v1672
    %v1674 = vpop.xlane.xlu0 %1673
    %v1675 = vsel %vm1291, %v1563, -inf
    %1676 = vmax.xlane.f32.xlu0 %v1675
    %v1677 = vpop.xlane.xlu0 %1676
    %v1678 = vsel %vm1291, %v1609, -inf
    %1679 = vmax.xlane.f32.xlu0 %v1678
    %v1680 = vpop.xlane.xlu0 %1679
    %v1681 = vsel %vm1291, %v1655, -inf
    %1682 = vmax.xlane.f32.xlu0 %v1681
    %v1683 = vpop.xlane.xlu0 %1682
    %v1684 = vsub.f32 %v1333, %v1662
    %v1685 = vsub.f32 %v1379, %v1665
    %v1686 = vsub.f32 %v1425, %v1668
    %v1687 = vsub.f32 %v1471, %v1671
    %v1688 = vsub.f32 %v1517, %v1674
    %v1689 = vsub.f32 %v1563, %v1677
    %v1690 = vsub.f32 %v1609, %v1680
    %v1691 = vsub.f32 %v1655, %v1683
    %v1692 = vmul.f32 %v1684, 1.442695
    %v1693 = vpow.pop %v1692
    %v1694 = vmul.f32 %v1685, 1.442695
    %v1695 = vpow.pop %v1694
    %v1696 = vmul.f32 %v1686, 1.442695
    %v1697 = vpow.pop %v1696
    %v1698 = vmul.f32 %v1687, 1.442695
    %v1699 = vpow.pop %v1698
    %v1700 = vmul.f32 %v1688, 1.442695
    %v1701 = vpow.pop %v1700
    %v1702 = vmul.f32 %v1689, 1.442695
    %v1703 = vpow.pop %v1702
    %v1704 = vmul.f32 %v1690, 1.442695
    %v1705 = vpow.pop %v1704
    %v1706 = vmul.f32 %v1691, 1.442695
    %v1707 = vpow.pop %v1706
    %v1708 = vsel %vm1291, %v1693, 0.0
    %1709 = vadd.xlane.f32.xlu0 %v1708
    %v1710 = vpop.xlane.xlu0 %1709
    %v1711 = vsel %vm1291, %v1695, 0.0
    %1712 = vadd.xlane.f32.xlu0 %v1711
    %v1713 = vpop.xlane.xlu0 %1712
    %v1714 = vsel %vm1291, %v1697, 0.0
    %1715 = vadd.xlane.f32.xlu0 %v1714
    %v1716 = vpop.xlane.xlu0 %1715
    %v1717 = vsel %vm1291, %v1699, 0.0
    %1718 = vadd.xlane.f32.xlu0 %v1717
    %v1719 = vpop.xlane.xlu0 %1718
    %v1720 = vsel %vm1291, %v1701, 0.0
    %1721 = vadd.xlane.f32.xlu0 %v1720
    %v1722 = vpop.xlane.xlu0 %1721
    %v1723 = vsel %vm1291, %v1703, 0.0
    %1724 = vadd.xlane.f32.xlu0 %v1723
    %v1725 = vpop.xlane.xlu0 %1724
    %v1726 = vsel %vm1291, %v1705, 0.0
    %1727 = vadd.xlane.f32.xlu0 %v1726
    %v1728 = vpop.xlane.xlu0 %1727
    %v1729 = vsel %vm1291, %v1707, 0.0
    %1730 = vadd.xlane.f32.xlu0 %v1729
    %v1731 = vpop.xlane.xlu0 %1730
    %v1732 = vrcp.pop %v1710
    %v1733 = vrcp.pop %v1713
    %v1734 = vrcp.pop %v1716
    %v1735 = vrcp.pop %v1719
    %v1736 = vrcp.pop %v1722
    %v1737 = vrcp.pop %v1725
    %v1738 = vrcp.pop %v1728
    %v1739 = vrcp.pop %v1731
    %v1740 = vmul.f32 %v1693, %v1732
    %v1741 = vmul.f32 %v1695, %v1733
    %v1742 = vmul.f32 %v1697, %v1734
    %v1743 = vmul.f32 %v1699, %v1735
    %v1744 = vmul.f32 %v1701, %v1736
    %v1745 = vmul.f32 %v1703, %v1737
    %v1746 = vmul.f32 %v1705, %v1738
    %v1747 = vmul.f32 %v1707, %v1739
    %v1748 = vpack.c.bf16 %v1740, %v1740
    %v1749 = vpack.c.bf16 %v1741, %v1741
    %v1750 = vpack.c.bf16 %v1742, %v1742
    %v1751 = vpack.c.bf16 %v1743, %v1743
    %v1752 = vpack.c.bf16 %v1744, %v1744
    %v1753 = vpack.c.bf16 %v1745, %v1745
    %v1754 = vpack.c.bf16 %v1746, %v1746
    %v1755 = vpack.c.bf16 %v1747, %v1747
    %v1757 = vsel %vm1291, %v1748, 0
    %vm1759 = vcmask 1043456
    %v1761 = vsel %vm1759, %v1283, 0
    %1763 = vmatprep.subr.bf16.mxu0 0
    %1764 = vmatpush1.bf16.msra.mxu0 %v1761
    %1765 = vmatprep.subr.bf16.mxu0 0
    %1766 = vmatpush1.bf16.msra.mxu0 0
    %1767 = vmatprep.subr.bf16.mxu0 0
    %1768 = vmatpush1.bf16.msra.mxu0 0
    %1769 = vmatprep.subr.bf16.mxu0 0
    %1770 = vmatpush1.bf16.msra.mxu0 0
    %1771 = vmatprep.subr.bf16.mxu0 0
    %1772 = vmatpush1.bf16.msra.mxu0 0
    %1773 = vmatprep.subr.bf16.mxu0 0
    %1774 = vmatpush1.bf16.msra.mxu0 0
    %1775 = vmatprep.subr.bf16.mxu0 0
    %1776 = vmatpush1.bf16.msra.mxu0 0
    %1777 = vmatprep.subr.bf16.mxu0 0
    %1778 = vmatpush1.bf16.msra.mxu0 0
    %1779 = vmatprep.subr.bf16.mxu0 0
    %1780 = vmatpush1.bf16.msra.mxu0 0
    %1781 = vmatprep.subr.bf16.mxu0 0
    %1782 = vmatpush1.bf16.msra.mxu0 0
    %1783 = vmatprep.subr.bf16.mxu0 0
    %1784 = vmatpush1.bf16.msra.mxu0 0
    %1785 = vmatprep.subr.bf16.mxu0 0
    %1786 = vmatpush1.bf16.msra.mxu0 0
    %1787 = vmatprep.subr.bf16.mxu0 0
    %1788 = vmatpush1.bf16.msra.mxu0 0
    %1789 = vmatprep.subr.bf16.mxu0 0
    %1790 = vmatpush1.bf16.msra.mxu0 0
    %1791 = vmatprep.subr.bf16.mxu0 0
    %1792 = vmatpush1.bf16.msra.mxu0 0
    %1793 = vmatprep.subr.bf16.mxu0 0
    %1794 = vmatpush1.bf16.msra.mxu0 0
    %1795 = vmatprep.mubr.bf16.mxu0 0
    %1796 = vmatmul.mubr.bf16.gmra.mrb[0].mxu0 %v1757
    %v1797 = vpop.f32.mrb[0].mxu0
    %v1798 = vadd.f32 0.0, %v1797
    %v1799 = vpop.f32.mrb[0].mxu0
    %v1800 = vpop.f32.mrb[0].mxu0
    %v1801 = vpop.f32.mrb[0].mxu0
    %1802 = vdwg.mxu0
    %v1804 = vsel %vm1291, %v1749, 0
    %v1807 = vsel %vm1759, %v1284, 0
    %1809 = vmatprep.subr.bf16.mxu0 0
    %1810 = vmatpush1.bf16.msra.mxu0 %v1807
    %1811 = vmatprep.subr.bf16.mxu0 0
    %1812 = vmatpush1.bf16.msra.mxu0 0
    %1813 = vmatprep.subr.bf16.mxu0 0
    %1814 = vmatpush1.bf16.msra.mxu0 0
    %1815 = vmatprep.subr.bf16.mxu0 0
    %1816 = vmatpush1.bf16.msra.mxu0 0
    %1817 = vmatprep.subr.bf16.mxu0 0
    %1818 = vmatpush1.bf16.msra.mxu0 0
    %1819 = vmatprep.subr.bf16.mxu0 0
    %1820 = vmatpush1.bf16.msra.mxu0 0
    %1821 = vmatprep.subr.bf16.mxu0 0
    %1822 = vmatpush1.bf16.msra.mxu0 0
    %1823 = vmatprep.subr.bf16.mxu0 0
    %1824 = vmatpush1.bf16.msra.mxu0 0
    %1825 = vmatprep.subr.bf16.mxu0 0
    %1826 = vmatpush1.bf16.msra.mxu0 0
    %1827 = vmatprep.subr.bf16.mxu0 0
    %1828 = vmatpush1.bf16.msra.mxu0 0
    %1829 = vmatprep.subr.bf16.mxu0 0
    %1830 = vmatpush1.bf16.msra.mxu0 0
    %1831 = vmatprep.subr.bf16.mxu0 0
    %1832 = vmatpush1.bf16.msra.mxu0 0
    %1833 = vmatprep.subr.bf16.mxu0 0
    %1834 = vmatpush1.bf16.msra.mxu0 0
    %1835 = vmatprep.subr.bf16.mxu0 0
    %1836 = vmatpush1.bf16.msra.mxu0 0
    %1837 = vmatprep.subr.bf16.mxu0 0
    %1838 = vmatpush1.bf16.msra.mxu0 0
    %1839 = vmatprep.subr.bf16.mxu0 0
    %1840 = vmatpush1.bf16.msra.mxu0 0
    %1841 = vmatprep.mubr.bf16.mxu0 0
    %1842 = vmatmul.mubr.bf16.gmra.mrb[0].mxu0 %v1804
    %v1843 = vpop.f32.mrb[0].mxu0
    %v1844 = vadd.f32 0.0, %v1843
    %v1845 = vpop.f32.mrb[0].mxu0
    %v1846 = vpop.f32.mrb[0].mxu0
    %v1847 = vpop.f32.mrb[0].mxu0
    %1848 = vdwg.mxu0
    %v1850 = vsel %vm1291, %v1750, 0
    %v1853 = vsel %vm1759, %v1285, 0
    %1855 = vmatprep.subr.bf16.mxu0 0
    %1856 = vmatpush1.bf16.msra.mxu0 %v1853
    %1857 = vmatprep.subr.bf16.mxu0 0
    %1858 = vmatpush1.bf16.msra.mxu0 0
    %1859 = vmatprep.subr.bf16.mxu0 0
    %1860 = vmatpush1.bf16.msra.mxu0 0
    %1861 = vmatprep.subr.bf16.mxu0 0
    %1862 = vmatpush1.bf16.msra.mxu0 0
    %1863 = vmatprep.subr.bf16.mxu0 0
    %1864 = vmatpush1.bf16.msra.mxu0 0
    %1865 = vmatprep.subr.bf16.mxu0 0
    %1866 = vmatpush1.bf16.msra.mxu0 0
    %1867 = vmatprep.subr.bf16.mxu0 0
    %1868 = vmatpush1.bf16.msra.mxu0 0
    %1869 = vmatprep.subr.bf16.mxu0 0
    %1870 = vmatpush1.bf16.msra.mxu0 0
    %1871 = vmatprep.subr.bf16.mxu0 0
    %1872 = vmatpush1.bf16.msra.mxu0 0
    %1873 = vmatprep.subr.bf16.mxu0 0
    %1874 = vmatpush1.bf16.msra.mxu0 0
    %1875 = vmatprep.subr.bf16.mxu0 0
    %1876 = vmatpush1.bf16.msra.mxu0 0
    %1877 = vmatprep.subr.bf16.mxu0 0
    %1878 = vmatpush1.bf16.msra.mxu0 0
    %1879 = vmatprep.subr.bf16.mxu0 0
    %1880 = vmatpush1.bf16.msra.mxu0 0
    %1881 = vmatprep.subr.bf16.mxu0 0
    %1882 = vmatpush1.bf16.msra.mxu0 0
    %1883 = vmatprep.subr.bf16.mxu0 0
    %1884 = vmatpush1.bf16.msra.mxu0 0
    %1885 = vmatprep.subr.bf16.mxu0 0
    %1886 = vmatpush1.bf16.msra.mxu0 0
    %1887 = vmatprep.mubr.bf16.mxu0 0
    %1888 = vmatmul.mubr.bf16.gmra.mrb[0].mxu0 %v1850
    %v1889 = vpop.f32.mrb[0].mxu0
    %v1890 = vadd.f32 0.0, %v1889
    %v1891 = vpop.f32.mrb[0].mxu0
    %v1892 = vpop.f32.mrb[0].mxu0
    %v1893 = vpop.f32.mrb[0].mxu0
    %1894 = vdwg.mxu0
    %v1896 = vsel %vm1291, %v1751, 0
    %v1899 = vsel %vm1759, %v1286, 0
    %1901 = vmatprep.subr.bf16.mxu0 0
    %1902 = vmatpush1.bf16.msra.mxu0 %v1899
    %1903 = vmatprep.subr.bf16.mxu0 0
    %1904 = vmatpush1.bf16.msra.mxu0 0
    %1905 = vmatprep.subr.bf16.mxu0 0
    %1906 = vmatpush1.bf16.msra.mxu0 0
    %1907 = vmatprep.subr.bf16.mxu0 0
    %1908 = vmatpush1.bf16.msra.mxu0 0
    %1909 = vmatprep.subr.bf16.mxu0 0
    %1910 = vmatpush1.bf16.msra.mxu0 0
    %1911 = vmatprep.subr.bf16.mxu0 0
    %1912 = vmatpush1.bf16.msra.mxu0 0
    %1913 = vmatprep.subr.bf16.mxu0 0
    %1914 = vmatpush1.bf16.msra.mxu0 0
    %1915 = vmatprep.subr.bf16.mxu0 0
    %1916 = vmatpush1.bf16.msra.mxu0 0
    %1917 = vmatprep.subr.bf16.mxu0 0
    %1918 = vmatpush1.bf16.msra.mxu0 0
    %1919 = vmatprep.subr.bf16.mxu0 0
    %1920 = vmatpush1.bf16.msra.mxu0 0
    %1921 = vmatprep.subr.bf16.mxu0 0
    %1922 = vmatpush1.bf16.msra.mxu0 0
    %1923 = vmatprep.subr.bf16.mxu0 0
    %1924 = vmatpush1.bf16.msra.mxu0 0
    %1925 = vmatprep.subr.bf16.mxu0 0
    %1926 = vmatpush1.bf16.msra.mxu0 0
    %1927 = vmatprep.subr.bf16.mxu0 0
    %1928 = vmatpush1.bf16.msra.mxu0 0
    %1929 = vmatprep.subr.bf16.mxu0 0
    %1930 = vmatpush1.bf16.msra.mxu0 0
    %1931 = vmatprep.subr.bf16.mxu0 0
    %1932 = vmatpush1.bf16.msra.mxu0 0
    %1933 = vmatprep.mubr.bf16.mxu0 0
    %1934 = vmatmul.mubr.bf16.gmra.mrb[0].mxu0 %v1896
    %v1935 = vpop.f32.mrb[0].mxu0
    %v1936 = vadd.f32 0.0, %v1935
    %v1937 = vpop.f32.mrb[0].mxu0
    %v1938 = vpop.f32.mrb[0].mxu0
    %v1939 = vpop.f32.mrb[0].mxu0
    %1940 = vdwg.mxu0
    %v1942 = vsel %vm1291, %v1752, 0
    %v1945 = vsel %vm1759, %v1287, 0
    %1947 = vmatprep.subr.bf16.mxu0 0
    %1948 = vmatpush1.bf16.msra.mxu0 %v1945
    %1949 = vmatprep.subr.bf16.mxu0 0
    %1950 = vmatpush1.bf16.msra.mxu0 0
    %1951 = vmatprep.subr.bf16.mxu0 0
    %1952 = vmatpush1.bf16.msra.mxu0 0
    %1953 = vmatprep.subr.bf16.mxu0 0
    %1954 = vmatpush1.bf16.msra.mxu0 0
    %1955 = vmatprep.subr.bf16.mxu0 0
    %1956 = vmatpush1.bf16.msra.mxu0 0
    %1957 = vmatprep.subr.bf16.mxu0 0
    %1958 = vmatpush1.bf16.msra.mxu0 0
    %1959 = vmatprep.subr.bf16.mxu0 0
    %1960 = vmatpush1.bf16.msra.mxu0 0
    %1961 = vmatprep.subr.bf16.mxu0 0
    %1962 = vmatpush1.bf16.msra.mxu0 0
    %1963 = vmatprep.subr.bf16.mxu0 0
    %1964 = vmatpush1.bf16.msra.mxu0 0
    %1965 = vmatprep.subr.bf16.mxu0 0
    %1966 = vmatpush1.bf16.msra.mxu0 0
    %1967 = vmatprep.subr.bf16.mxu0 0
    %1968 = vmatpush1.bf16.msra.mxu0 0
    %1969 = vmatprep.subr.bf16.mxu0 0
    %1970 = vmatpush1.bf16.msra.mxu0 0
    %1971 = vmatprep.subr.bf16.mxu0 0
    %1972 = vmatpush1.bf16.msra.mxu0 0
    %1973 = vmatprep.subr.bf16.mxu0 0
    %1974 = vmatpush1.bf16.msra.mxu0 0
    %1975 = vmatprep.subr.bf16.mxu0 0
    %1976 = vmatpush1.bf16.msra.mxu0 0
    %1977 = vmatprep.subr.bf16.mxu0 0
    %1978 = vmatpush1.bf16.msra.mxu0 0
    %1979 = vmatprep.mubr.bf16.mxu0 0
    %1980 = vmatmul.mubr.bf16.gmra.mrb[0].mxu0 %v1942
    %v1981 = vpop.f32.mrb[0].mxu0
    %v1982 = vadd.f32 0.0, %v1981
    %v1983 = vpop.f32.mrb[0].mxu0
    %v1984 = vpop.f32.mrb[0].mxu0
    %v1985 = vpop.f32.mrb[0].mxu0
    %1986 = vdwg.mxu0
    %v1988 = vsel %vm1291, %v1753, 0
    %v1991 = vsel %vm1759, %v1288, 0
    %1993 = vmatprep.subr.bf16.mxu0 0
    %1994 = vmatpush1.bf16.msra.mxu0 %v1991
    %1995 = vmatprep.subr.bf16.mxu0 0
    %1996 = vmatpush1.bf16.msra.mxu0 0
    %1997 = vmatprep.subr.bf16.mxu0 0
    %1998 = vmatpush1.bf16.msra.mxu0 0
    %1999 = vmatprep.subr.bf16.mxu0 0
    %2000 = vmatpush1.bf16.msra.mxu0 0
    %2001 = vmatprep.subr.bf16.mxu0 0
    %2002 = vmatpush1.bf16.msra.mxu0 0
    %2003 = vmatprep.subr.bf16.mxu0 0
    %2004 = vmatpush1.bf16.msra.mxu0 0
    %2005 = vmatprep.subr.bf16.mxu0 0
    %2006 = vmatpush1.bf16.msra.mxu0 0
    %2007 = vmatprep.subr.bf16.mxu0 0
    %2008 = vmatpush1.bf16.msra.mxu0 0
    %2009 = vmatprep.subr.bf16.mxu0 0
    %2010 = vmatpush1.bf16.msra.mxu0 0
    %2011 = vmatprep.subr.bf16.mxu0 0
    %2012 = vmatpush1.bf16.msra.mxu0 0
    %2013 = vmatprep.subr.bf16.mxu0 0
    %2014 = vmatpush1.bf16.msra.mxu0 0
    %2015 = vmatprep.subr.bf16.mxu0 0
    %2016 = vmatpush1.bf16.msra.mxu0 0
    %2017 = vmatprep.subr.bf16.mxu0 0
    %2018 = vmatpush1.bf16.msra.mxu0 0
    %2019 = vmatprep.subr.bf16.mxu0 0
    %2020 = vmatpush1.bf16.msra.mxu0 0
    %2021 = vmatprep.subr.bf16.mxu0 0
    %2022 = vmatpush1.bf16.msra.mxu0 0
    %2023 = vmatprep.subr.bf16.mxu0 0
    %2024 = vmatpush1.bf16.msra.mxu0 0
    %2025 = vmatprep.mubr.bf16.mxu0 0
    %2026 = vmatmul.mubr.bf16.gmra.mrb[0].mxu0 %v1988
    %v2027 = vpop.f32.mrb[0].mxu0
    %v2028 = vadd.f32 0.0, %v2027
    %v2029 = vpop.f32.mrb[0].mxu0
    %v2030 = vpop.f32.mrb[0].mxu0
    %v2031 = vpop.f32.mrb[0].mxu0
    %2032 = vdwg.mxu0
    %v2034 = vsel %vm1291, %v1754, 0
    %v2037 = vsel %vm1759, %v1289, 0
    %2039 = vmatprep.subr.bf16.mxu0 0
    %2040 = vmatpush1.bf16.msra.mxu0 %v2037
    %2041 = vmatprep.subr.bf16.mxu0 0
    %2042 = vmatpush1.bf16.msra.mxu0 0
    %2043 = vmatprep.subr.bf16.mxu0 0
    %2044 = vmatpush1.bf16.msra.mxu0 0
    %2045 = vmatprep.subr.bf16.mxu0 0
    %2046 = vmatpush1.bf16.msra.mxu0 0
    %2047 = vmatprep.subr.bf16.mxu0 0
    %2048 = vmatpush1.bf16.msra.mxu0 0
    %2049 = vmatprep.subr.bf16.mxu0 0
    %2050 = vmatpush1.bf16.msra.mxu0 0
    %2051 = vmatprep.subr.bf16.mxu0 0
    %2052 = vmatpush1.bf16.msra.mxu0 0
    %2053 = vmatprep.subr.bf16.mxu0 0
    %2054 = vmatpush1.bf16.msra.mxu0 0
    %2055 = vmatprep.subr.bf16.mxu0 0
    %2056 = vmatpush1.bf16.msra.mxu0 0
    %2057 = vmatprep.subr.bf16.mxu0 0
    %2058 = vmatpush1.bf16.msra.mxu0 0
    %2059 = vmatprep.subr.bf16.mxu0 0
    %2060 = vmatpush1.bf16.msra.mxu0 0
    %2061 = vmatprep.subr.bf16.mxu0 0
    %2062 = vmatpush1.bf16.msra.mxu0 0
    %2063 = vmatprep.subr.bf16.mxu0 0
    %2064 = vmatpush1.bf16.msra.mxu0 0
    %2065 = vmatprep.subr.bf16.mxu0 0
    %2066 = vmatpush1.bf16.msra.mxu0 0
    %2067 = vmatprep.subr.bf16.mxu0 0
    %2068 = vmatpush1.bf16.msra.mxu0 0
    %2069 = vmatprep.subr.bf16.mxu0 0
    %2070 = vmatpush1.bf16.msra.mxu0 0
    %2071 = vmatprep.mubr.bf16.mxu0 0
    %2072 = vmatmul.mubr.bf16.gmra.mrb[0].mxu0 %v2034
    %v2073 = vpop.f32.mrb[0].mxu0
    %v2074 = vadd.f32 0.0, %v2073
    %v2075 = vpop.f32.mrb[0].mxu0
    %v2076 = vpop.f32.mrb[0].mxu0
    %v2077 = vpop.f32.mrb[0].mxu0
    %2078 = vdwg.mxu0
    %v2080 = vsel %vm1291, %v1755, 0
    %v2083 = vsel %vm1759, %v1290, 0
    %2085 = vmatprep.subr.bf16.mxu0 0
    %2086 = vmatpush1.bf16.msra.mxu0 %v2083
    %2087 = vmatprep.subr.bf16.mxu0 0
    %2088 = vmatpush1.bf16.msra.mxu0 0
    %2089 = vmatprep.subr.bf16.mxu0 0
    %2090 = vmatpush1.bf16.msra.mxu0 0
    %2091 = vmatprep.subr.bf16.mxu0 0
    %2092 = vmatpush1.bf16.msra.mxu0 0
    %2093 = vmatprep.subr.bf16.mxu0 0
    %2094 = vmatpush1.bf16.msra.mxu0 0
    %2095 = vmatprep.subr.bf16.mxu0 0
    %2096 = vmatpush1.bf16.msra.mxu0 0
    %2097 = vmatprep.subr.bf16.mxu0 0
    %2098 = vmatpush1.bf16.msra.mxu0 0
    %2099 = vmatprep.subr.bf16.mxu0 0
    %2100 = vmatpush1.bf16.msra.mxu0 0
    %2101 = vmatprep.subr.bf16.mxu0 0
    %2102 = vmatpush1.bf16.msra.mxu0 0
    %2103 = vmatprep.subr.bf16.mxu0 0
    %2104 = vmatpush1.bf16.msra.mxu0 0
    %2105 = vmatprep.subr.bf16.mxu0 0
    %2106 = vmatpush1.bf16.msra.mxu0 0
    %2107 = vmatprep.subr.bf16.mxu0 0
    %2108 = vmatpush1.bf16.msra.mxu0 0
    %2109 = vmatprep.subr.bf16.mxu0 0
    %2110 = vmatpush1.bf16.msra.mxu0 0
    %2111 = vmatprep.subr.bf16.mxu0 0
    %2112 = vmatpush1.bf16.msra.mxu0 0
    %2113 = vmatprep.subr.bf16.mxu0 0
    %2114 = vmatpush1.bf16.msra.mxu0 0
    %2115 = vmatprep.subr.bf16.mxu0 0
    %2116 = vmatpush1.bf16.msra.mxu0 0
    %2117 = vmatprep.mubr.bf16.mxu0 0
    %2118 = vmatmul.mubr.bf16.gmra.mrb[0].mxu0 %v2080
    %v2119 = vpop.f32.mrb[0].mxu0
    %v2120 = vadd.f32 0.0, %v2119
    %v2121 = vpop.f32.mrb[0].mxu0
    %v2122 = vpop.f32.mrb[0].mxu0
    %v2123 = vpop.f32.mrb[0].mxu0
    %2124 = vdwg.mxu0
    %v2125 = vcombine.low %v1798, %v1982
    %v2126 = vcombine.high %v1798, %v1982
    %v2128 = vunpack.c.l.s4 1983009808
    %v2129 = vunpack.c.0.s8 %v2128
    %v2130 = vlaneseq
    %v2131 = vshrl.u32 %v2130, 7
    %v2132 = vsub.s32 %v2129, %v2131
    %v2133 = vrot.slane %v2125, %v2132
    %v2135 = vunpack.c.l.s4 1983009808
    %v2136 = vunpack.c.0.s8 %v2135
    %v2137 = vlaneseq
    %v2138 = vshrl.u32 %v2137, 7
    %v2139 = vsub.s32 %v2136, %v2138
    %v2140 = vrot.slane %v2126, %v2139
    %v2141 = vcombine.low %v1890, %v2074
    %v2142 = vcombine.high %v1890, %v2074
    %v2144 = vunpack.c.l.s4 1983009808
    %v2145 = vunpack.c.0.s8 %v2144
    %v2146 = vlaneseq
    %v2147 = vshrl.u32 %v2146, 7
    %v2148 = vsub.s32 %v2145, %v2147
    %v2149 = vrot.slane %v2141, %v2148
    %v2151 = vunpack.c.l.s4 1983009808
    %v2152 = vunpack.c.0.s8 %v2151
    %v2153 = vlaneseq
    %v2154 = vshrl.u32 %v2153, 7
    %v2155 = vsub.s32 %v2152, %v2154
    %v2156 = vrot.slane %v2142, %v2155
    %v2157 = vcombine.low %v2133, %v2149
    %v2158 = vcombine.high %v2133, %v2149
    %v2160 = vunpack.c.l.s4 1934713408
    %v2161 = vunpack.c.0.s8 %v2160
    %v2162 = vlaneseq
    %v2163 = vshrl.u32 %v2162, 7
    %v2164 = vsub.s32 %v2161, %v2163
    %v2165 = vrot.slane %v2157, %v2164
    %v2167 = vunpack.c.l.s4 1934713408
    %v2168 = vunpack.c.0.s8 %v2167
    %v2169 = vlaneseq
    %v2170 = vshrl.u32 %v2169, 7
    %v2171 = vsub.s32 %v2168, %v2170
    %v2172 = vrot.slane %v2158, %v2171
    %v2173 = vcombine.low %v2140, %v2156
    %v2174 = vcombine.high %v2140, %v2156
    %v2176 = vunpack.c.l.s4 1934713408
    %v2177 = vunpack.c.0.s8 %v2176
    %v2178 = vlaneseq
    %v2179 = vshrl.u32 %v2178, 7
    %v2180 = vsub.s32 %v2177, %v2179
    %v2181 = vrot.slane %v2173, %v2180
    %v2183 = vunpack.c.l.s4 1934713408
    %v2184 = vunpack.c.0.s8 %v2183
    %v2185 = vlaneseq
    %v2186 = vshrl.u32 %v2185, 7
    %v2187 = vsub.s32 %v2184, %v2186
    %v2188 = vrot.slane %v2174, %v2187
    %v2189 = vcombine.high %v2165, 0.0
    %v2190 = vcombine.high %v2172, 0.0
    %v2191 = vcombine.high %v2181, 0.0
    %v2192 = vcombine.high %v2188, 0.0
    %v2193 = vcombine.low %v1844, %v2028
    %v2194 = vcombine.high %v1844, %v2028
    %v2196 = vunpack.c.l.s4 1983009808
    %v2197 = vunpack.c.0.s8 %v2196
    %v2198 = vlaneseq
    %v2199 = vshrl.u32 %v2198, 7
    %v2200 = vsub.s32 %v2197, %v2199
    %v2201 = vrot.slane %v2193, %v2200
    %v2203 = vunpack.c.l.s4 1983009808
    %v2204 = vunpack.c.0.s8 %v2203
    %v2205 = vlaneseq
    %v2206 = vshrl.u32 %v2205, 7
    %v2207 = vsub.s32 %v2204, %v2206
    %v2208 = vrot.slane %v2194, %v2207
    %v2209 = vcombine.low %v1936, %v2120
    %v2210 = vcombine.high %v1936, %v2120
    %v2212 = vunpack.c.l.s4 1983009808
    %v2213 = vunpack.c.0.s8 %v2212
    %v2214 = vlaneseq
    %v2215 = vshrl.u32 %v2214, 7
    %v2216 = vsub.s32 %v2213, %v2215
    %v2217 = vrot.slane %v2209, %v2216
    %v2219 = vunpack.c.l.s4 1983009808
    %v2220 = vunpack.c.0.s8 %v2219
    %v2221 = vlaneseq
    %v2222 = vshrl.u32 %v2221, 7
    %v2223 = vsub.s32 %v2220, %v2222
    %v2224 = vrot.slane %v2210, %v2223
    %v2225 = vcombine.low %v2201, %v2217
    %v2226 = vcombine.high %v2201, %v2217
    %v2228 = vunpack.c.l.s4 1934713408
    %v2229 = vunpack.c.0.s8 %v2228
    %v2230 = vlaneseq
    %v2231 = vshrl.u32 %v2230, 7
    %v2232 = vsub.s32 %v2229, %v2231
    %v2233 = vrot.slane %v2225, %v2232
    %v2235 = vunpack.c.l.s4 1934713408
    %v2236 = vunpack.c.0.s8 %v2235
    %v2237 = vlaneseq
    %v2238 = vshrl.u32 %v2237, 7
    %v2239 = vsub.s32 %v2236, %v2238
    %v2240 = vrot.slane %v2226, %v2239
    %v2241 = vcombine.low %v2208, %v2224
    %v2242 = vcombine.high %v2208, %v2224
    %v2244 = vunpack.c.l.s4 1934713408
    %v2245 = vunpack.c.0.s8 %v2244
    %v2246 = vlaneseq
    %v2247 = vshrl.u32 %v2246, 7
    %v2248 = vsub.s32 %v2245, %v2247
    %v2249 = vrot.slane %v2241, %v2248
    %v2251 = vunpack.c.l.s4 1934713408
    %v2252 = vunpack.c.0.s8 %v2251
    %v2253 = vlaneseq
    %v2254 = vshrl.u32 %v2253, 7
    %v2255 = vsub.s32 %v2252, %v2254
    %v2256 = vrot.slane %v2242, %v2255
    %v2257 = vcombine.high %v2233, 0.0
    %v2258 = vcombine.high %v2240, 0.0
    %v2259 = vcombine.high %v2249, 0.0
    %v2260 = vcombine.high %v2256, 0.0
    %v2261 = vcombine.low %v2165, %v2172
    %v2263 = vunpack.c.l.s4 1983009808
    %v2264 = vunpack.c.0.s8 %v2263
    %v2265 = vlaneseq
    %v2266 = vshrl.u32 %v2265, 7
    %v2267 = vsub.s32 %v2264, %v2266
    %v2268 = vrot.slane %v2261, %v2267
    %v2269 = vcombine.low %v2189, %v2190
    %v2271 = vunpack.c.l.s4 1983009808
    %v2272 = vunpack.c.0.s8 %v2271
    %v2273 = vlaneseq
    %v2274 = vshrl.u32 %v2273, 7
    %v2275 = vsub.s32 %v2272, %v2274
    %v2276 = vrot.slane %v2269, %v2275
    %v2277 = vcombine.low %v2181, %v2188
    %v2279 = vunpack.c.l.s4 1983009808
    %v2280 = vunpack.c.0.s8 %v2279
    %v2281 = vlaneseq
    %v2282 = vshrl.u32 %v2281, 7
    %v2283 = vsub.s32 %v2280, %v2282
    %v2284 = vrot.slane %v2277, %v2283
    %v2285 = vcombine.low %v2191, %v2192
    %v2287 = vunpack.c.l.s4 1983009808
    %v2288 = vunpack.c.0.s8 %v2287
    %v2289 = vlaneseq
    %v2290 = vshrl.u32 %v2289, 7
    %v2291 = vsub.s32 %v2288, %v2290
    %v2292 = vrot.slane %v2285, %v2291
    %v2293 = vcombine.low %v2268, %v2276
    %v2294 = vcombine.high %v2268, %v2276
    %v2296 = vunpack.c.l.s4 1934713408
    %v2297 = vunpack.c.0.s8 %v2296
    %v2298 = vlaneseq
    %v2299 = vshrl.u32 %v2298, 7
    %v2300 = vsub.s32 %v2297, %v2299
    %v2301 = vrot.slane %v2293, %v2300
    %v2303 = vunpack.c.l.s4 1934713408
    %v2304 = vunpack.c.0.s8 %v2303
    %v2305 = vlaneseq
    %v2306 = vshrl.u32 %v2305, 7
    %v2307 = vsub.s32 %v2304, %v2306
    %v2308 = vrot.slane %v2294, %v2307
    %v2309 = vcombine.low %v2284, %v2292
    %v2310 = vcombine.high %v2284, %v2292
    %v2312 = vunpack.c.l.s4 1934713408
    %v2313 = vunpack.c.0.s8 %v2312
    %v2314 = vlaneseq
    %v2315 = vshrl.u32 %v2314, 7
    %v2316 = vsub.s32 %v2313, %v2315
    %v2317 = vrot.slane %v2309, %v2316
    %v2319 = vunpack.c.l.s4 1934713408
    %v2320 = vunpack.c.0.s8 %v2319
    %v2321 = vlaneseq
    %v2322 = vshrl.u32 %v2321, 7
    %v2323 = vsub.s32 %v2320, %v2322
    %v2324 = vrot.slane %v2310, %v2323
    %v2325 = vcombine.low %v2301, %v2317
    %v2326 = vcombine.high %v2301, %v2317
    %v2327 = vcombine.low %v2308, %v2324
    %v2328 = vcombine.high %v2308, %v2324
    %v2329 = vcombine.low %v2233, %v2240
    %v2331 = vunpack.c.l.s4 1983009808
    %v2332 = vunpack.c.0.s8 %v2331
    %v2333 = vlaneseq
    %v2334 = vshrl.u32 %v2333, 7
    %v2335 = vsub.s32 %v2332, %v2334
    %v2336 = vrot.slane %v2329, %v2335
    %v2337 = vcombine.low %v2257, %v2258
    %v2339 = vunpack.c.l.s4 1983009808
    %v2340 = vunpack.c.0.s8 %v2339
    %v2341 = vlaneseq
    %v2342 = vshrl.u32 %v2341, 7
    %v2343 = vsub.s32 %v2340, %v2342
    %v2344 = vrot.slane %v2337, %v2343
    %v2345 = vcombine.low %v2249, %v2256
    %v2347 = vunpack.c.l.s4 1983009808
    %v2348 = vunpack.c.0.s8 %v2347
    %v2349 = vlaneseq
    %v2350 = vshrl.u32 %v2349, 7
    %v2351 = vsub.s32 %v2348, %v2350
    %v2352 = vrot.slane %v2345, %v2351
    %v2353 = vcombine.low %v2259, %v2260
    %v2355 = vunpack.c.l.s4 1983009808
    %v2356 = vunpack.c.0.s8 %v2355
    %v2357 = vlaneseq
    %v2358 = vshrl.u32 %v2357, 7
    %v2359 = vsub.s32 %v2356, %v2358
    %v2360 = vrot.slane %v2353, %v2359
    %v2361 = vcombine.low %v2336, %v2344
    %v2362 = vcombine.high %v2336, %v2344
    %v2364 = vunpack.c.l.s4 1934713408
    %v2365 = vunpack.c.0.s8 %v2364
    %v2366 = vlaneseq
    %v2367 = vshrl.u32 %v2366, 7
    %v2368 = vsub.s32 %v2365, %v2367
    %v2369 = vrot.slane %v2361, %v2368
    %v2371 = vunpack.c.l.s4 1934713408
    %v2372 = vunpack.c.0.s8 %v2371
    %v2373 = vlaneseq
    %v2374 = vshrl.u32 %v2373, 7
    %v2375 = vsub.s32 %v2372, %v2374
    %v2376 = vrot.slane %v2362, %v2375
    %v2377 = vcombine.low %v2352, %v2360
    %v2378 = vcombine.high %v2352, %v2360
    %v2380 = vunpack.c.l.s4 1934713408
    %v2381 = vunpack.c.0.s8 %v2380
    %v2382 = vlaneseq
    %v2383 = vshrl.u32 %v2382, 7
    %v2384 = vsub.s32 %v2381, %v2383
    %v2385 = vrot.slane %v2377, %v2384
    %v2387 = vunpack.c.l.s4 1934713408
    %v2388 = vunpack.c.0.s8 %v2387
    %v2389 = vlaneseq
    %v2390 = vshrl.u32 %v2389, 7
    %v2391 = vsub.s32 %v2388, %v2390
    %v2392 = vrot.slane %v2378, %v2391
    %v2393 = vcombine.low %v2369, %v2385
    %v2394 = vcombine.high %v2369, %v2385
    %v2395 = vcombine.low %v2376, %v2392
    %v2396 = vcombine.high %v2376, %v2392
    %2399 = vrot.lane.b32.xlu0 %v2326, 8
    %v2400 = vpop.permute.xlu0 %2399
    %2401 = vrot.lane.b32.xlu0 %v2394, 8
    %v2402 = vpop.permute.xlu0 %2401
    %2407 = vrot.lane.b32.xlu0 %v2327, 16
    %v2408 = vpop.permute.xlu0 %2407
    %2409 = vrot.lane.b32.xlu0 %v2395, 16
    %v2410 = vpop.permute.xlu0 %2409
    %2415 = vrot.lane.b32.xlu0 %v2328, 24
    %v2416 = vpop.permute.xlu0 %2415
    %2417 = vrot.lane.b32.xlu0 %v2396, 24
    %v2418 = vpop.permute.xlu0 %2417
    %v2421 = vsel %vm1291, %v2325, %v2400
    %v2422 = vsel %vm1291, %v2393, %v2402
    %vm2423 = vcmask 130048
    %v2424 = vsel %vm2423, %v2421, %v2408
    %v2425 = vsel %vm2423, %v2422, %v2410
    %vm2426 = vcmask 195584
    %v2427 = vsel %vm2426, %v2424, %v2416
    %v2428 = vsel %vm2426, %v2425, %v2418
    %v2429 = vpack.c.bf16 %v2428, %v2427
    %v2430 = vld [vmem:[%s9] sm:$0xf]
    %v2431 = vld [vmem:[%s9 + $0x4] sm:$0xf]
    %v2432 = vld [vmem:[%s9 + $0x8] sm:$0xf]
    %v2433 = vld [vmem:[%s9 + $0xc] sm:$0xf]
    %v2434 = vld [vmem:[#allocation14] sm:$0x1]
    %v2436 = vlaneseq
    %v2437 = vshrl.u32 %v2436, 7
    %v2438 = vsub.s32 0, %v2437
    %v2439 = vrot.slane %v2434, %v2438
    %v2445 = vunpack.c.l.b16 %v2430
    %v2446 = vunpack.c.l.b16 %v2431
    %v2447 = vunpack.c.l.b16 %v2432
    %v2448 = vunpack.c.l.b16 %v2433
    %v2449 = vpack.c.b16 %v2446, %v2445
    %v2450 = vpack.c.b16 %v2448, %v2447
    %v2454 = vsel %vm210, %v2429, 0
    %2456 = vmatprep.subr.bf16.mxu0 0
    %2457 = vmatpush1.bf16.msra.mxu0 %v2449
    %2458 = vmatprep.subr.bf16.mxu0 0
    %2459 = vmatpush1.bf16.msra.mxu0 %v2450
    %2460 = vmatprep.subr.bf16.mxu0 0
    %2461 = vmatpush1.bf16.msra.mxu0 0
    %2462 = vmatprep.subr.bf16.mxu0 0
    %2463 = vmatpush1.bf16.msra.mxu0 0
    %2464 = vmatprep.subr.bf16.mxu0 0
    %2465 = vmatpush1.bf16.msra.mxu0 0
    %2466 = vmatprep.subr.bf16.mxu0 0
    %2467 = vmatpush1.bf16.msra.mxu0 0
    %2468 = vmatprep.subr.bf16.mxu0 0
    %2469 = vmatpush1.bf16.msra.mxu0 0
    %2470 = vmatprep.subr.bf16.mxu0 0
    %2471 = vmatpush1.bf16.msra.mxu0 0
    %2472 = vmatprep.subr.bf16.mxu0 0
    %2473 = vmatpush1.bf16.msra.mxu0 0
    %2474 = vmatprep.subr.bf16.mxu0 0
    %2475 = vmatpush1.bf16.msra.mxu0 0
    %2476 = vmatprep.subr.bf16.mxu0 0
    %2477 = vmatpush1.bf16.msra.mxu0 0
    %2478 = vmatprep.subr.bf16.mxu0 0
    %2479 = vmatpush1.bf16.msra.mxu0 0
    %2480 = vmatprep.subr.bf16.mxu0 0
    %2481 = vmatpush1.bf16.msra.mxu0 0
    %2482 = vmatprep.subr.bf16.mxu0 0
    %2483 = vmatpush1.bf16.msra.mxu0 0
    %2484 = vmatprep.subr.bf16.mxu0 0
    %2485 = vmatpush1.bf16.msra.mxu0 0
    %2486 = vmatprep.subr.bf16.mxu0 0
    %2487 = vmatpush1.bf16.msra.mxu0 0
    %2488 = vmatprep.mubr.bf16.mxu0 0
    %2489 = vmatmul.mubr.bf16.gmra.mrb[0].mxu0 %v2454
    %v2490 = vpop.f32.mrb[0].mxu0
    %v2491 = vadd.f32 %v2439, %v2490
    %v2492 = vpop.f32.mrb[0].mxu0
    %v2493 = vpop.f32.mrb[0].mxu0
    %v2494 = vadd.f32 %v2439, %v2493
    %v2495 = vpop.f32.mrb[0].mxu0
    %2496 = vdwg.mxu0
    %v2497 = vadd.f32 %v180, %v2491
    %v2498 = vadd.f32 %v181, %v2494
    %v2499 = vpack.c.bf16 %v2498, %v2497
    %v2500 = vld [vmem:[#allocation16] sm:$0xf]
    %v2501 = vld [vmem:[#allocation16 + $0x4] sm:$0xf]
    %v2502 = vld [vmem:[#allocation16 + $0x8] sm:$0xf]
    %v2503 = vld [vmem:[#allocation16 + $0xc] sm:$0xf]
    %v2504 = vld [vmem:[#allocation17] sm:$0x1]
    %v2506 = vlaneseq
    %v2507 = vshrl.u32 %v2506, 7
    %v2508 = vsub.s32 0, %v2507
    %v2509 = vrot.slane %v2504, %v2508
    %v2515 = vunpack.c.l.b16 %v2500
    %v2516 = vunpack.c.l.b16 %v2501
    %v2517 = vunpack.c.l.b16 %v2502
    %v2518 = vunpack.c.l.b16 %v2503
    %v2519 = vpack.c.b16 %v2516, %v2515
    %v2520 = vpack.c.b16 %v2518, %v2517
    %v2524 = vsel %vm210, %v2499, 0
    %2526 = vmatprep.subr.bf16.mxu0 0
    %2527 = vmatpush1.bf16.msra.mxu0 %v2519
    %2528 = vmatprep.subr.bf16.mxu0 0
    %2529 = vmatpush1.bf16.msra.mxu0 %v2520
    %2530 = vmatprep.subr.bf16.mxu0 0
    %2531 = vmatpush1.bf16.msra.mxu0 0
    %2532 = vmatprep.subr.bf16.mxu0 0
    %2533 = vmatpush1.bf16.msra.mxu0 0
    %2534 = vmatprep.subr.bf16.mxu0 0
    %2535 = vmatpush1.bf16.msra.mxu0 0
    %2536 = vmatprep.subr.bf16.mxu0 0
    %2537 = vmatpush1.bf16.msra.mxu0 0
    %2538 = vmatprep.subr.bf16.mxu0 0
    %2539 = vmatpush1.bf16.msra.mxu0 0
    %2540 = vmatprep.subr.bf16.mxu0 0
    %2541 = vmatpush1.bf16.msra.mxu0 0
    %2542 = vmatprep.subr.bf16.mxu0 0
    %2543 = vmatpush1.bf16.msra.mxu0 0
    %2544 = vmatprep.subr.bf16.mxu0 0
    %2545 = vmatpush1.bf16.msra.mxu0 0
    %2546 = vmatprep.subr.bf16.mxu0 0
    %2547 = vmatpush1.bf16.msra.mxu0 0
    %2548 = vmatprep.subr.bf16.mxu0 0
    %2549 = vmatpush1.bf16.msra.mxu0 0
    %2550 = vmatprep.subr.bf16.mxu0 0
    %2551 = vmatpush1.bf16.msra.mxu0 0
    %2552 = vmatprep.subr.bf16.mxu0 0
    %2553 = vmatpush1.bf16.msra.mxu0 0
    %2554 = vmatprep.subr.bf16.mxu0 0
    %2555 = vmatpush1.bf16.msra.mxu0 0
    %2556 = vmatprep.subr.bf16.mxu0 0
    %2557 = vmatpush1.bf16.msra.mxu0 0
    %2558 = vmatprep.mubr.bf16.mxu0 0
    %2559 = vmatmul.mubr.bf16.gmra.mrb[0].mxu0 %v2524
    %v2560 = vpop.f32.mrb[0].mxu0
    %v2561 = vadd.f32 %v2509, %v2560
    %v2562 = vpop.f32.mrb[0].mxu0
    %v2563 = vpop.f32.mrb[0].mxu0
    %v2564 = vadd.f32 %v2509, %v2563
    %v2565 = vpop.f32.mrb[0].mxu0
    %2566 = vdwg.mxu0
    %v2567 = vpack.c.bf16 %v2564, %v2561
    %v2568 = vld [vmem:[%s13] sm:$0xf]
    %v2569 = vld [vmem:[%s13 + $0x4] sm:$0xf]
    %v2570 = vld [vmem:[%s13 + $0x8] sm:$0xf]
    %v2571 = vld [vmem:[%s13 + $0xc] sm:$0xf]
    %v2572 = vld [vmem:[%s14] sm:$0x1]
    %v2574 = vlaneseq
    %v2575 = vshrl.u32 %v2574, 7
    %v2576 = vsub.s32 0, %v2575
    %v2577 = vrot.slane %v2572, %v2576
    %v2583 = vunpack.c.l.b16 %v2568
    %v2584 = vunpack.c.l.b16 %v2569
    %v2585 = vunpack.c.l.b16 %v2570
    %v2586 = vunpack.c.l.b16 %v2571
    %v2587 = vpack.c.b16 %v2584, %v2583
    %v2588 = vpack.c.b16 %v2586, %v2585
    %v2592 = vsel %vm210, %v2567, 0
    %2594 = vmatprep.subr.bf16.mxu0 0
    %2595 = vmatpush1.bf16.msra.mxu0 %v2587
    %2596 = vmatprep.subr.bf16.mxu0 0
    %2597 = vmatpush1.bf16.msra.mxu0 %v2588
    %2598 = vmatprep.subr.bf16.mxu0 0
    %2599 = vmatpush1.bf16.msra.mxu0 0
    %2600 = vmatprep.subr.bf16.mxu0 0
    %2601 = vmatpush1.bf16.msra.mxu0 0
    %2602 = vmatprep.subr.bf16.mxu0 0
    %2603 = vmatpush1.bf16.msra.mxu0 0
    %2604 = vmatprep.subr.bf16.mxu0 0
    %2605 = vmatpush1.bf16.msra.mxu0 0
    %2606 = vmatprep.subr.bf16.mxu0 0
    %2607 = vmatpush1.bf16.msra.mxu0 0
    %2608 = vmatprep.subr.bf16.mxu0 0
    %2609 = vmatpush1.bf16.msra.mxu0 0
    %2610 = vmatprep.subr.bf16.mxu0 0
    %2611 = vmatpush1.bf16.msra.mxu0 0
    %2612 = vmatprep.subr.bf16.mxu0 0
    %2613 = vmatpush1.bf16.msra.mxu0 0
    %2614 = vmatprep.subr.bf16.mxu0 0
    %2615 = vmatpush1.bf16.msra.mxu0 0
    %2616 = vmatprep.subr.bf16.mxu0 0
    %2617 = vmatpush1.bf16.msra.mxu0 0
    %2618 = vmatprep.subr.bf16.mxu0 0
    %2619 = vmatpush1.bf16.msra.mxu0 0
    %2620 = vmatprep.subr.bf16.mxu0 0
    %2621 = vmatpush1.bf16.msra.mxu0 0
    %2622 = vmatprep.subr.bf16.mxu0 0
    %2623 = vmatpush1.bf16.msra.mxu0 0
    %2624 = vmatprep.subr.bf16.mxu0 0
    %2625 = vmatpush1.bf16.msra.mxu0 0
    %2626 = vmatprep.mubr.bf16.mxu0 0
    %2627 = vmatmul.mubr.bf16.gmra.mrb[0].mxu0 %v2592
    %v2628 = vpop.f32.mrb[0].mxu0
    %v2629 = vadd.f32 %v2577, %v2628
    %v2630 = vpop.f32.mrb[0].mxu0
    %v2631 = vpop.f32.mrb[0].mxu0
    %v2632 = vadd.f32 %v2577, %v2631
    %v2633 = vpop.f32.mrb[0].mxu0
    %2634 = vdwg.mxu0
    %v2635 = vmax.f32 %v2629, 0.0
    %v2636 = vmax.f32 %v2632, 0.0
    %v2637 = vadd.f32 %v2635, %v2497
    %v2638 = vadd.f32 %v2636, %v2498
    %2639 = vst.msk [vmem:[#allocation19] sm:$0xff] %vm210, %v2637
    %2640 = vst.msk [vmem:[#allocation19 + $0x8] sm:$0xff] %vm210, %v2638
    // Predicated region
    $region102: #{tpu_custom_call.1} parent=1 // pred_check
      _
    $region103: #{tpu_custom_call.1} parent=1 // pred_check_branch
      %2642 = sbr.rel (0) target = $region105
    $region104: #{tpu_custom_call.1} parent=1 // pred_region
      %s2644 = ssub.s32 256, 256
      %2645 = vsyncadd [#allocation4], %s2644
      %s2646 = sshll.u32 [#allocation19], 4
      %s2647 = int_to_ptr.vmem [resolvable:$true] %s2646
      %2652 = dma.vmem_to_hbm [thread:$0]  %s2647, 256, %s15, [#allocation4], 128, 128, 8
    $region105: #{tpu_custom_call.1} parent=1 // pred_fallthru
      _
    // Predicated region
    $region106: #{tpu_custom_call.1} parent=1 // pred_check
      _
    $region107: #{tpu_custom_call.1} parent=1 // pred_check_branch
      %2654 = sbr.rel (0) target = $region109
    $region108: #{tpu_custom_call.1} parent=1 // pred_region
      %2655 = dma.done [#allocation4], 256
    $region109: #{tpu_custom_call.1} parent=1 // pred_fallthru
      _
    %2656 = vsyncpa [#allocation3], 1
    %2657 = vsyncpa [#allocation6], 1
    %2658 = vsyncpa [#allocation9], 1
    %2659 = vsyncpa [#allocation12], 1
    %2660 = vsyncpa [#allocation15], 1
    %2661 = vsyncpa [#allocation18], 1
    %2662 = vsyncpa [#allocation4], 1

</llo_original>
